<compile_context>
chip_gen: v7x
topology: tpu7x:2x2x1
jax: 0.10.0
libtpu: 0.0.40
codegen_flags: <defaults>
</compile_context>

<pallas_src>
from functools import partial

import jax
import jax.numpy as jnp
from jax import lax
from jax.experimental import pallas as pl
from jax.experimental.pallas import tpu as pltpu
import numpy as np


# ---------------------------------------------------------------------------
# Chip detection (defaults only; both code paths are correct on every chip).
# ---------------------------------------------------------------------------
def _device_kind():
    try:
        return jax.devices()[0].device_kind.lower()
    except Exception:
        return ""


def _tensorcores_per_chip():
    # Only v7x has 2 TensorCores per chip; default to 1 if unknown.
    return 2 if "v7" in _device_kind() else 1


def _default_mxu_dtype():
    # v5e's MXU is bf16/int-native (f32 matmuls are emulated) -> bf16 inputs
    # with f32 accumulation by default there; strict f32 elsewhere.
    kind = _device_kind()
    if "v5e" in kind or "v5 lite" in kind or "v5lite" in kind:
        return jnp.bfloat16
    return jnp.float32


# ---------------------------------------------------------------------------
# Per-batch-element attention body (shared by both kernel variants).
#   xb   : (C*D, HW) f32      w : (OD, C*D)      bias : (OD, 1)
#   returns gamma * xb + x_a, shape (C*D, HW) f32
# ---------------------------------------------------------------------------
def _rsa_one(xb, w, bias, gamma, ck_d, mxu_dtype):
    # Fused K/Q/V projection: one MXU matmul in the '(c d) (h w)' layout.
    # In bf16 mode both operands are cast; accumulation stays f32.
    kqv = jnp.dot(w.astype(mxu_dtype), xb.astype(mxu_dtype),
                  preferred_element_type=jnp.float32) + bias      # (OD, HW)

    k = kqv[:ck_d]                                                # (Ck*D, HW) f32
    q = kqv[ck_d:2 * ck_d]                                        # (Ck*D, HW) f32
    v = kqv[2 * ck_d:]                                            # (C*D,  HW) f32

    # Transposed scores: sT[j, i] = sum_f q[f, j] k[f, i] == scores[i, j].
    # Kept f32: contraction is only CkD=8 deep (bf16 gains nothing on the
    # MXU) and f32 logits keep the softmax exact.
    sT = lax.dot_general(q, k, (((0,), (0,)), ((), ())),
                         preferred_element_type=jnp.float32)      # (HW, HW)

    # Softmax over j == the sublane axis of sT, so max/sum reductions land
    # directly as lane-resident (1, HW) rows and normalization can be
    # deferred to the (CD, HW) output instead of the (HW, HW) scores.
    m = jnp.max(sT, axis=0, keepdims=True)                        # (1, HW)
    eT = jnp.exp(sT - m)                                          # (HW, HW) EUP
    denom = jnp.sum(eT, axis=0, keepdims=True)                    # (1, HW) >= 1
    r = pl.reciprocal(denom, approx=True)                         # EUP slot
    r = r * (2.0 - denom * r)                                     # 1 Newton step

    # Un-normalized attention output: plain matmul, full 256-deep contraction.
    x_a = jnp.dot(v.astype(mxu_dtype), eT.astype(mxu_dtype),
                  preferred_element_type=jnp.float32)             # (C*D, HW)

    # Residual + deferred softmax normalization (r broadcasts over sublanes).
    return gamma * xb + x_a * r


# ---------------------------------------------------------------------------
# Kernel variant A: whole batch in one grid step (single-TC chips).
# ---------------------------------------------------------------------------
def rsa_kernel_collapsed(gamma_ref, x_ref, w_ref, b_ref, out_ref, *,
                         ck_d, mxu_dtype):
    w = w_ref[...]
    bias = b_ref[...]
    gamma = gamma_ref[0]
    for b in range(x_ref.shape[0]):                 # tiny static unroll (B=2)
        out_ref[b] = _rsa_one(x_ref[b], w, bias, gamma, ck_d, mxu_dtype)


# ---------------------------------------------------------------------------
# Kernel variant B: one batch element per grid step (v7x: one per TensorCore).
# ---------------------------------------------------------------------------
def rsa_kernel_batched(gamma_ref, x_ref, w_ref, b_ref, out_ref, *,
                       ck_d, mxu_dtype):
    out_ref[...] = _rsa_one(x_ref[...], w_ref[...], b_ref[...],
                            gamma_ref[0], ck_d, mxu_dtype)


# ---------------------------------------------------------------------------
# Wrapper (public layout matches PyTorch Conv3d: x is (B, C, D, H, W) f32).
# ---------------------------------------------------------------------------
def rsa_block(x, wk, bk, wq, bq, wv, bv, gamma, *, mxu_dtype=None,
              batch_in_grid=None):
    B, C, D, H, W = x.shape
    Ck = wk.shape[0]
    HW = H * W
    CD, CkD = C * D, Ck * D
    OD = (2 * Ck + C) * D

    if mxu_dtype is None:
        mxu_dtype = _default_mxu_dtype()
    if batch_in_grid is None:
        batch_in_grid = (B > 1) and (_tensorcores_per_chip() >= 2)

    # Pack the three pointwise-conv weights and Kronecker-expand with I_D so
    # the projection acts directly on the '(c d) (h w)' layout (no in-kernel
    # reshapes).  Tiny host-side arrays: (OD, CD) = (80, 64) f32 = 20 KiB.
    w_cat = jnp.concatenate([wk, wq, wv], axis=0)                 # (2Ck+C, C)
    b_cat = jnp.concatenate([bk, bq, bv], axis=0)                 # (2Ck+C, 1)
    eye_d = jnp.eye(D, dtype=x.dtype)
    w_exp = jnp.kron(w_cat, eye_d)                                # (OD, CD)
    b_exp = jnp.kron(b_cat, jnp.ones((D, 1), x.dtype))            # (OD, 1)
    # NOTE: the bias stays a narrow (OD,1) VMEM operand on purpose; folding it
    # into the matmul (ones row appended to x) would cost an extra host-side
    # pass over x, which dwarfs the ~20-vreg one-time in-kernel broadcast.

    # 'b c d h w -> b (c d) (h w)' is a contiguous reshape (pure glue).
    x_cd = x.reshape(B, CD, HW)
    gamma = gamma.reshape((1,)).astype(jnp.float32)

    if batch_in_grid:
        kernel = partial(rsa_kernel_batched, ck_d=CkD, mxu_dtype=mxu_dtype)
        grid = (B,)
        x_spec = pl.BlockSpec((pl.Squeezed(), CD, HW), lambda b: (b, 0, 0))
        out_spec = pl.BlockSpec((pl.Squeezed(), CD, HW), lambda b: (b, 0, 0))
        w_spec = pl.BlockSpec((OD, CD), lambda b: (0, 0))
        b_spec = pl.BlockSpec((OD, 1), lambda b: (0, 0))
        semantics = ("parallel",)
    else:
        kernel = partial(rsa_kernel_collapsed, ck_d=CkD, mxu_dtype=mxu_dtype)
        grid = (1,)
        x_spec = pl.BlockSpec((B, CD, HW), lambda i: (0, 0, 0))
        out_spec = pl.BlockSpec((B, CD, HW), lambda i: (0, 0, 0))
        w_spec = pl.BlockSpec((OD, CD), lambda i: (0, 0))
        b_spec = pl.BlockSpec((OD, 1), lambda i: (0, 0))
        semantics = ("arbitrary",)

    out = pl.pallas_call(
        kernel,
        grid=grid,
        in_specs=[
            pl.BlockSpec(memory_space=pltpu.MemorySpace.SMEM),    # gamma (1,)
            x_spec,                                               # x
            w_spec,                                               # W_exp
            b_spec,                                               # b_exp
        ],
        out_specs=out_spec,
        out_shape=jax.ShapeDtypeStruct((B, CD, HW), jnp.float32),
        compiler_params=pltpu.CompilerParams(
            dimension_semantics=semantics),
    )(gamma, x_cd, w_exp, b_exp)

    # 'b (c d) (h w) -> b c d h w'
    return out.reshape(B, C, D, H, W)


# ---------------------------------------------------------------------------
# Pure-JAX reference (mirrors the PyTorch RSA_Block forward exactly)
# ---------------------------------------------------------------------------
def rsa_reference(x, wk, bk, wq, bq, wv, bv, gamma):
    B, C, D, H, W = x.shape
    Ck = wk.shape[0]
    x2 = x.reshape(B, C, -1)
    k = jnp.einsum('oc,bcn->bon', wk, x2) + bk[None]
    q = jnp.einsum('oc,bcn->bon', wq, x2) + bq[None]
    v = jnp.einsum('oc,bcn->bon', wv, x2) + bv[None]
    k = k.reshape(B, Ck * D, H * W)
    q = q.reshape(B, Ck * D, H * W)
    v = v.reshape(B, C * D, H * W)
    kt = jnp.swapaxes(k, 1, 2)                       # (B, HW, CkD)
    dot = jnp.einsum('bij,bjd->bid', kt, q)          # (B, HW, HW)
    att = jax.nn.softmax(dot, axis=-1)
    att = jnp.swapaxes(att, 1, 2)
    x_a = jnp.einsum('bij,bjd->bid', v, att)         # (B, C*D, HW)
    x_a = x_a.reshape(B, C, D, H, W)
    return gamma * x + x_a


if __name__ == "__main__":
    # Small but lane-dense demo shape: H*W = 256 (multiple of 128).
    B, C, D, H, W = 2, 16, 4, 16, 16                 # ou_ch = 16 -> C//8 = 2
    Ck = C // 8

    key = jax.random.PRNGKey(0)
    ks = jax.random.split(key, 8)
    x = jax.random.normal(ks[0], (B, C, D, H, W), jnp.float32)
    wk = jax.random.normal(ks[1], (Ck, C), jnp.float32) * 0.1
    bk = jax.random.normal(ks[2], (Ck, 1), jnp.float32) * 0.05
    wq = jax.random.normal(ks[3], (Ck, C), jnp.float32) * 0.1
    bq = jax.random.normal(ks[4], (Ck, 1), jnp.float32) * 0.05
    wv = jax.random.normal(ks[5], (C, C), jnp.float32) * 0.1
    bv = jax.random.normal(ks[6], (C, 1), jnp.float32) * 0.05
    gamma = jnp.ones((1,), jnp.float32)              # nn.Parameter(torch.ones(1))

    ref = rsa_reference(x, wk, bk, wq, bq, wv, bv, gamma)

    # Strict f32 MXU path, collapsed-batch kernel (single-TC layout).
    out_f32 = jax.block_until_ready(
        rsa_block(x, wk, bk, wq, bq, wv, bv, gamma,
                  mxu_dtype=jnp.float32, batch_in_grid=False))
    np.testing.assert_allclose(np.asarray(out_f32), np.asarray(ref),
                               rtol=1e-3, atol=1e-3)

    # Strict f32 MXU path, batch-parallel grid (v7x layout) — also correct on
    # single-TC chips, just exercised here so both code paths are validated.
    out_grid = jax.block_until_ready(
        rsa_block(x, wk, bk, wq, bq, wv, bv, gamma,
                  mxu_dtype=jnp.float32, batch_in_grid=True))
    np.testing.assert_allclose(np.asarray(out_grid), np.asarray(ref),
                               rtol=1e-3, atol=1e-3)

    # bf16-on-MXU throughput path (v5e default); f32 accumulation + f32
    # softmax logits keep the error small.
    out_bf16 = jax.block_until_ready(
        rsa_block(x, wk, bk, wq, bq, wv, bv, gamma,
                  mxu_dtype=jnp.bfloat16, batch_in_grid=False))
    np.testing.assert_allclose(np.asarray(out_bf16), np.asarray(ref),
                               rtol=2e-2, atol=2e-2)

    # Auto defaults (chip-dependent mxu_dtype / batching).
    out_auto = jax.block_until_ready(
        rsa_block(x, wk, bk, wq, bq, wv, bv, gamma))
    np.testing.assert_allclose(np.asarray(out_auto), np.asarray(ref),
                               rtol=2e-2, atol=2e-2)

    print("KERNEL_OK")
</pallas_src>

<mosaic_0001>
module attributes {stable_mosaic.version = 11 : i64} {
  func.func @rsa_kernel_collapsed(%arg0: i32, %arg1: memref<1xf32, #tpu.memory_space<smem>>, %arg2: memref<2x64x256xf32, #tpu.memory_space<vmem>>, %arg3: memref<80x64xf32, #tpu.memory_space<vmem>>, %arg4: memref<80x1xf32, #tpu.memory_space<vmem>>, %arg5: memref<2x64x256xf32, #tpu.memory_space<vmem>>) attributes {dimension_semantics = [#tpu.dimension_semantics<arbitrary>], iteration_bounds = array<i64: 1>, scalar_prefetch = 0 : i64, scratch_operands = 0 : i64, tpu.core_type = #tpu.core_type<tc>, window_params = [{transform_indices = @transform_0, window_bounds = array<i64: 1>}, {pipeline_mode = #tpu.pipeline_mode<synchronous>, transform_indices = @transform_1, window_bounds = array<i64: 2, 64, 256>}, {pipeline_mode = #tpu.pipeline_mode<synchronous>, transform_indices = @transform_2, window_bounds = array<i64: 80, 64>}, {pipeline_mode = #tpu.pipeline_mode<synchronous>, transform_indices = @transform_3, window_bounds = array<i64: 80, 1>}, {pipeline_mode = #tpu.pipeline_mode<synchronous>, transform_indices = @transform_4, window_bounds = array<i64: 2, 64, 256>}]} {
    %c0 = arith.constant 0 : index
    %c0_0 = arith.constant 0 : index
    %0 = vector.load %arg3[%c0, %c0_0] : memref<80x64xf32, #tpu.memory_space<vmem>>, vector<80x64xf32>
    %c0_1 = arith.constant 0 : index
    %c0_2 = arith.constant 0 : index
    %1 = vector.load %arg4[%c0_1, %c0_2] : memref<80x1xf32, #tpu.memory_space<vmem>>, vector<80x1xf32>
    %c0_3 = arith.constant 0 : index
    %2 = memref.load %arg1[%c0_3] : memref<1xf32, #tpu.memory_space<smem>>
    %c0_4 = arith.constant 0 : index
    %c0_5 = arith.constant 0 : index
    %c0_6 = arith.constant 0 : index
    %3 = vector.load %arg2[%c0_4, %c0_5, %c0_6] : memref<2x64x256xf32, #tpu.memory_space<vmem>>, vector<1x64x256xf32>
    %4 = vector.shape_cast %3 : vector<1x64x256xf32> to vector<64x256xf32>
    %cst = arith.constant dense<0.000000e+00> : vector<80x256xf32>
    %5 = tpu.matmul %0, %4, %cst {dimension_numbers = #tpu.dot_dimension_numbers<[1], [0], [0], [1], [0, 0, 1, 1], [], []>} : vector<80x64xf32>, vector<64x256xf32>, vector<80x256xf32> -> vector<80x256xf32>
    %6 = vector.broadcast %1 : vector<80x1xf32> to vector<80x256xf32>
    %7 = arith.addf %5, %6 : vector<80x256xf32>
    %8 = vector.extract_strided_slice %7 {offsets = [0, 0], sizes = [8, 256], strides = [1, 1]} : vector<80x256xf32> to vector<8x256xf32>
    %9 = vector.extract_strided_slice %7 {offsets = [8, 0], sizes = [8, 256], strides = [1, 1]} : vector<80x256xf32> to vector<8x256xf32>
    %10 = vector.extract_strided_slice %7 {offsets = [16, 0], sizes = [64, 256], strides = [1, 1]} : vector<80x256xf32> to vector<64x256xf32>
    %cst_7 = arith.constant dense<0.000000e+00> : vector<256x256xf32>
    %11 = tpu.matmul %9, %8, %cst_7 {dimension_numbers = #tpu.dot_dimension_numbers<[0], [0], [1], [1], [0, 1, 1, 1], [], []>} : vector<8x256xf32>, vector<8x256xf32>, vector<256x256xf32> -> vector<256x256xf32>
    %cst_8 = arith.constant dense<0xFF800000> : vector<256xf32>
    %12 = vector.multi_reduction <maximumf>, %11, %cst_8 [0] : vector<256x256xf32> to vector<256xf32>
    %13 = vector.shape_cast %12 : vector<256xf32> to vector<1x256xf32>
    %14 = vector.broadcast %13 : vector<1x256xf32> to vector<256x256xf32>
    %15 = arith.subf %11, %14 : vector<256x256xf32>
    %16 = math.exp %15 : vector<256x256xf32>
    %cst_9 = arith.constant dense<0.000000e+00> : vector<256xf32>
    %17 = vector.multi_reduction <add>, %16, %cst_9 [0] : vector<256x256xf32> to vector<256xf32>
    %18 = vector.shape_cast %17 : vector<256xf32> to vector<1x256xf32>
    %19 = tpu.reciprocal %18 {approx = true} : vector<1x256xf32> -> vector<1x256xf32>
    %20 = arith.mulf %18, %19 : vector<1x256xf32>
    %cst_10 = arith.constant 2.000000e+00 : f32
    %21 = vector.broadcast %cst_10 : f32 to vector<1x256xf32>
    %22 = arith.subf %21, %20 : vector<1x256xf32>
    %23 = arith.mulf %19, %22 : vector<1x256xf32>
    %cst_11 = arith.constant dense<0.000000e+00> : vector<64x256xf32>
    %24 = tpu.matmul %10, %16, %cst_11 {dimension_numbers = #tpu.dot_dimension_numbers<[1], [0], [0], [1], [0, 0, 1, 1], [], []>} : vector<64x256xf32>, vector<256x256xf32>, vector<64x256xf32> -> vector<64x256xf32>
    %25 = vector.broadcast %2 : f32 to vector<64x256xf32>
    %26 = arith.mulf %25, %4 : vector<64x256xf32>
    %27 = vector.broadcast %23 : vector<1x256xf32> to vector<64x256xf32>
    %28 = arith.mulf %24, %27 : vector<64x256xf32>
    %29 = arith.addf %26, %28 : vector<64x256xf32>
    %c0_12 = arith.constant 0 : index
    %c0_13 = arith.constant 0 : index
    %c0_14 = arith.constant 0 : index
    %30 = vector.load %arg5[%c0_12, %c0_13, %c0_14] : memref<2x64x256xf32, #tpu.memory_space<vmem>>, vector<1x64x256xf32>
    %31 = vector.shape_cast %30 : vector<1x64x256xf32> to vector<64x256xf32>
    %32 = vector.shape_cast %29 : vector<64x256xf32> to vector<1x64x256xf32>
    tpu.vector_store %arg5[%c0_12, %c0_13, %c0_14], %32 {strides = array<i32>} : memref<2x64x256xf32, #tpu.memory_space<vmem>>, vector<1x64x256xf32>,
    %c1 = arith.constant 1 : index
    %c0_15 = arith.constant 0 : index
    %c0_16 = arith.constant 0 : index
    %33 = vector.load %arg2[%c1, %c0_15, %c0_16] : memref<2x64x256xf32, #tpu.memory_space<vmem>>, vector<1x64x256xf32>
    %34 = vector.shape_cast %33 : vector<1x64x256xf32> to vector<64x256xf32>
    %cst_17 = arith.constant dense<0.000000e+00> : vector<80x256xf32>
    %35 = tpu.matmul %0, %34, %cst_17 {dimension_numbers = #tpu.dot_dimension_numbers<[1], [0], [0], [1], [0, 0, 1, 1], [], []>} : vector<80x64xf32>, vector<64x256xf32>, vector<80x256xf32> -> vector<80x256xf32>
    %36 = vector.broadcast %1 : vector<80x1xf32> to vector<80x256xf32>
    %37 = arith.addf %35, %36 : vector<80x256xf32>
    %38 = vector.extract_strided_slice %37 {offsets = [0, 0], sizes = [8, 256], strides = [1, 1]} : vector<80x256xf32> to vector<8x256xf32>
    %39 = vector.extract_strided_slice %37 {offsets = [8, 0], sizes = [8, 256], strides = [1, 1]} : vector<80x256xf32> to vector<8x256xf32>
    %40 = vector.extract_strided_slice %37 {offsets = [16, 0], sizes = [64, 256], strides = [1, 1]} : vector<80x256xf32> to vector<64x256xf32>
    %cst_18 = arith.constant dense<0.000000e+00> : vector<256x256xf32>
    %41 = tpu.matmul %39, %38, %cst_18 {dimension_numbers = #tpu.dot_dimension_numbers<[0], [0], [1], [1], [0, 1, 1, 1], [], []>} : vector<8x256xf32>, vector<8x256xf32>, vector<256x256xf32> -> vector<256x256xf32>
    %cst_19 = arith.constant dense<0xFF800000> : vector<256xf32>
    %42 = vector.multi_reduction <maximumf>, %41, %cst_19 [0] : vector<256x256xf32> to vector<256xf32>
    %43 = vector.shape_cast %42 : vector<256xf32> to vector<1x256xf32>
    %44 = vector.broadcast %43 : vector<1x256xf32> to vector<256x256xf32>
    %45 = arith.subf %41, %44 : vector<256x256xf32>
    %46 = math.exp %45 : vector<256x256xf32>
    %cst_20 = arith.constant dense<0.000000e+00> : vector<256xf32>
    %47 = vector.multi_reduction <add>, %46, %cst_20 [0] : vector<256x256xf32> to vector<256xf32>
    %48 = vector.shape_cast %47 : vector<256xf32> to vector<1x256xf32>
    %49 = tpu.reciprocal %48 {approx = true} : vector<1x256xf32> -> vector<1x256xf32>
    %50 = arith.mulf %48, %49 : vector<1x256xf32>
    %cst_21 = arith.constant 2.000000e+00 : f32
    %51 = vector.broadcast %cst_21 : f32 to vector<1x256xf32>
    %52 = arith.subf %51, %50 : vector<1x256xf32>
    %53 = arith.mulf %49, %52 : vector<1x256xf32>
    %cst_22 = arith.constant dense<0.000000e+00> : vector<64x256xf32>
    %54 = tpu.matmul %40, %46, %cst_22 {dimension_numbers = #tpu.dot_dimension_numbers<[1], [0], [0], [1], [0, 0, 1, 1], [], []>} : vector<64x256xf32>, vector<256x256xf32>, vector<64x256xf32> -> vector<64x256xf32>
    %55 = vector.broadcast %2 : f32 to vector<64x256xf32>
    %56 = arith.mulf %55, %34 : vector<64x256xf32>
    %57 = vector.broadcast %53 : vector<1x256xf32> to vector<64x256xf32>
    %58 = arith.mulf %54, %57 : vector<64x256xf32>
    %59 = arith.addf %56, %58 : vector<64x256xf32>
    %c1_23 = arith.constant 1 : index
    %c0_24 = arith.constant 0 : index
    %c0_25 = arith.constant 0 : index
    %60 = vector.load %arg5[%c1_23, %c0_24, %c0_25] : memref<2x64x256xf32, #tpu.memory_space<vmem>>, vector<1x64x256xf32>
    %61 = vector.shape_cast %60 : vector<1x64x256xf32> to vector<64x256xf32>
    %62 = vector.shape_cast %59 : vector<64x256xf32> to vector<1x64x256xf32>
    tpu.vector_store %arg5[%c1_23, %c0_24, %c0_25], %62 {strides = array<i32>} : memref<2x64x256xf32, #tpu.memory_space<vmem>>, vector<1x64x256xf32>,
    return
  }
  func.func @transform_0(%arg0: i32) -> i32 {
    %c0_i32 = arith.constant 0 : i32
    %c0_i32_0 = arith.constant 0 : i32
    return %c0_i32 : i32
  }
  func.func @transform_1(%arg0: i32) -> (i32, i32, i32) {
    %c0_i32 = arith.constant 0 : i32
    %c0_i32_0 = arith.constant 0 : i32
    %c0_i32_1 = arith.constant 0 : i32
    %c0_i32_2 = arith.constant 0 : i32
    return %c0_i32, %c0_i32_0, %c0_i32_1 : i32, i32, i32
  }
  func.func @transform_2(%arg0: i32) -> (i32, i32) {
    %c0_i32 = arith.constant 0 : i32
    %c0_i32_0 = arith.constant 0 : i32
    %c0_i32_1 = arith.constant 0 : i32
    return %c0_i32, %c0_i32_0 : i32, i32
  }
  func.func @transform_3(%arg0: i32) -> (i32, i32) {
    %c0_i32 = arith.constant 0 : i32
    %c0_i32_0 = arith.constant 0 : i32
    %c0_i32_1 = arith.constant 0 : i32
    return %c0_i32, %c0_i32_0 : i32, i32
  }
  func.func @transform_4(%arg0: i32) -> (i32, i32, i32) {
    %c0_i32 = arith.constant 0 : i32
    %c0_i32_0 = arith.constant 0 : i32
    %c0_i32_1 = arith.constant 0 : i32
    %c0_i32_2 = arith.constant 0 : i32
    return %c0_i32, %c0_i32_0, %c0_i32_1 : i32, i32, i32
  }
}

</mosaic_0001>

<llo_original>
// kernel: tpu_custom_call.1
$region0: #{tpu_custom_call.1}
  #allocation0 [shape = 'u32[]', space=smem, size = 0x4, offset = 0x4, fixed_abs, tag = 'smem constant byte address 0x4 - core index']
  #allocation1 [shape = 'u32[144,128]{1,0:T(1,128)}', space=vmem, size = 0x12000, scoped, tag = 'internal scratch']
  #allocation2 [shape = 'f32[1]{0:T(128)S(6)}', space=smem, size = 0x200, scoped, tag = 'scoped memory for tpu_custom_call.1']
  %s0 = inlined_call_operand.<no memory space> [shape: f32[1], index: 0, kind: input, shape index: {}]
  %s1 = inlined_call_operand.hbm [shape: f32[2,64,256], index: 1, kind: input, shape index: {}]
  %s2 = inlined_call_operand.vmem [shape: f32[80,64], index: 2, kind: input, shape index: {}]
  %s3 = inlined_call_operand.vmem [shape: f32[80,1], index: 3, kind: input, shape index: {}]
  %s4 = inlined_call_operand.hbm [shape: f32[2,64,256], index: 4, kind: output, shape index: {}]
  %s5 = sld [smem:[#allocation0]]
  $region30: #{tpu_custom_call.1} parent=0
    _
  %s7 = ssub.s32 1, %s5
  %s8 = scalar_select 0, %s7, %s5
  %9 = sst [smem:[#allocation2]] %s0
  $region1: #{tpu_custom_call.1} parent=0
    #allocation3 [shape = 'u8[131072]{0}', space=vmem, size = 0x20000, scoped, tag = 'input window, operand 1, single buffered']
    #allocation4 [shape = 's32[1]{0}', space=sflag, size = 0x4, scoped, tag = 'scoped memory for tpu_custom_call.1']
    #allocation5 [shape = 's32[1]{0}', space=sflag, size = 0x4, scoped, tag = 'scoped memory for tpu_custom_call.1']
    #allocation6 [shape = 'u8[131072]{0}', space=vmem, size = 0x20000, scoped, tag = 'output window, operand 0, single buffered']
    %10 = vsyncpa [#allocation4], 0
    %11 = vsyncpa [#allocation5], 0
    // Predicated region
    $region2: #{tpu_custom_call.1} parent=1 // pred_check
      _
    $region3: #{tpu_custom_call.1} parent=1 // pred_check_branch
      %13 = sbr.rel (0) target = $region5
    $region4: #{tpu_custom_call.1} parent=1 // pred_region
      _
    $region5: #{tpu_custom_call.1} parent=1 // pred_fallthru
      _
    // Predicated region
    $region6: #{tpu_custom_call.1} parent=1 // pred_check
      _
    $region7: #{tpu_custom_call.1} parent=1 // pred_check_branch
      %15 = sbr.rel (0) target = $region9
    $region8: #{tpu_custom_call.1} parent=1 // pred_region
      %s17 = ssub.s32 4096, 4096
      %18 = vsyncadd [#allocation4], %s17
      %s19 = sshll.u32 [#allocation3], 4
      %s20 = int_to_ptr.vmem [resolvable:$true] %s19
      %25 = dma.hbm_to_vmem [thread:$0]  %s1, 4096, %s20, [#allocation4], 256, 256, 16
    $region9: #{tpu_custom_call.1} parent=1 // pred_fallthru
      _
    // Predicated region
    $region10: #{tpu_custom_call.1} parent=1 // pred_check
      _
    $region11: #{tpu_custom_call.1} parent=1 // pred_check_branch
      %27 = sbr.rel (0) target = $region13
    $region12: #{tpu_custom_call.1} parent=1 // pred_region
      _
    $region13: #{tpu_custom_call.1} parent=1 // pred_fallthru
      _
    // Predicated region
    $region14: #{tpu_custom_call.1} parent=1 // pred_check
      _
    $region15: #{tpu_custom_call.1} parent=1 // pred_check_branch
      %29 = sbr.rel (0) target = $region17
    $region16: #{tpu_custom_call.1} parent=1 // pred_region
      _
    $region17: #{tpu_custom_call.1} parent=1 // pred_fallthru
      _
    // Predicated region
    $region18: #{tpu_custom_call.1} parent=1 // pred_check
      _
    $region19: #{tpu_custom_call.1} parent=1 // pred_check_branch
      %31 = sbr.rel (0) target = $region21
    $region20: #{tpu_custom_call.1} parent=1 // pred_region
      %32 = dma.done [#allocation4], 4096
    $region21: #{tpu_custom_call.1} parent=1 // pred_fallthru
      _
    %v33 = vld [vmem:[%s2] sm:$0xff]
    %v34 = vld [vmem:[%s2 + $0x8] sm:$0xff]
    %v35 = vld [vmem:[%s2 + $0x10] sm:$0xff]
    %v36 = vld [vmem:[%s2 + $0x18] sm:$0xff]
    %v37 = vld [vmem:[%s2 + $0x20] sm:$0xff]
    %v38 = vld [vmem:[%s2 + $0x28] sm:$0xff]
    %v39 = vld [vmem:[%s2 + $0x30] sm:$0xff]
    %v40 = vld [vmem:[%s2 + $0x38] sm:$0xff]
    %v41 = vld [vmem:[%s2 + $0x40] sm:$0xff]
    %v42 = vld [vmem:[%s2 + $0x48] sm:$0xff]
    %v43 = vld [vmem:[%s3] sm:$0xff]
    %v44 = vld [vmem:[%s3 + $0x8] sm:$0xff]
    %v45 = vld [vmem:[%s3 + $0x10] sm:$0xff]
    %v46 = vld [vmem:[%s3 + $0x18] sm:$0xff]
    %v47 = vld [vmem:[%s3 + $0x20] sm:$0xff]
    %v48 = vld [vmem:[%s3 + $0x28] sm:$0xff]
    %v49 = vld [vmem:[%s3 + $0x30] sm:$0xff]
    %v50 = vld [vmem:[%s3 + $0x38] sm:$0xff]
    %v51 = vld [vmem:[%s3 + $0x40] sm:$0xff]
    %v52 = vld [vmem:[%s3 + $0x48] sm:$0xff]
    %s53 = sld [smem:[#allocation2]]
    %v54 = vld [vmem:[#allocation3] sm:$0xff]
    %v55 = vld [vmem:[#allocation3 + $0x8] sm:$0xff]
    %v56 = vld [vmem:[#allocation3 + $0x10] sm:$0xff]
    %v57 = vld [vmem:[#allocation3 + $0x18] sm:$0xff]
    %v58 = vld [vmem:[#allocation3 + $0x20] sm:$0xff]
    %v59 = vld [vmem:[#allocation3 + $0x28] sm:$0xff]
    %v60 = vld [vmem:[#allocation3 + $0x30] sm:$0xff]
    %v61 = vld [vmem:[#allocation3 + $0x38] sm:$0xff]
    %v62 = vld [vmem:[#allocation3 + $0x40] sm:$0xff]
    %v63 = vld [vmem:[#allocation3 + $0x48] sm:$0xff]
    %v64 = vld [vmem:[#allocation3 + $0x50] sm:$0xff]
    %v65 = vld [vmem:[#allocation3 + $0x58] sm:$0xff]
    %v66 = vld [vmem:[#allocation3 + $0x60] sm:$0xff]
    %v67 = vld [vmem:[#allocation3 + $0x68] sm:$0xff]
    %v68 = vld [vmem:[#allocation3 + $0x70] sm:$0xff]
    %v69 = vld [vmem:[#allocation3 + $0x78] sm:$0xff]
    %71 = vset.pattern.permute.xlu0 0
    %72 = vperm.xlu0 %71, %v43
    %v73 = vpop.permute.xlu0 %72
    %76 = vset.pattern.permute.xlu0 0
    %77 = vperm.xlu0 %76, %v44
    %v78 = vpop.permute.xlu0 %77
    %81 = vset.pattern.permute.xlu0 0
    %82 = vperm.xlu0 %81, %v45
    %v83 = vpop.permute.xlu0 %82
    %86 = vset.pattern.permute.xlu0 0
    %87 = vperm.xlu0 %86, %v46
    %v88 = vpop.permute.xlu0 %87
    %91 = vset.pattern.permute.xlu0 0
    %92 = vperm.xlu0 %91, %v47
    %v93 = vpop.permute.xlu0 %92
    %96 = vset.pattern.permute.xlu0 0
    %97 = vperm.xlu0 %96, %v48
    %v98 = vpop.permute.xlu0 %97
    %101 = vset.pattern.permute.xlu0 0
    %102 = vperm.xlu0 %101, %v49
    %v103 = vpop.permute.xlu0 %102
    %106 = vset.pattern.permute.xlu0 0
    %107 = vperm.xlu0 %106, %v50
    %v108 = vpop.permute.xlu0 %107
    %111 = vset.pattern.permute.xlu0 0
    %112 = vperm.xlu0 %111, %v51
    %v113 = vpop.permute.xlu0 %112
    %116 = vset.pattern.permute.xlu0 0
    %117 = vperm.xlu0 %116, %v52
    %v118 = vpop.permute.xlu0 %117
    %vm120 = vcmask 523264
    %v122 = vsel %vm120, %v33, 0
    %v125 = vsel %vm120, %v34, 0
    %v128 = vsel %vm120, %v35, 0
    %v131 = vsel %vm120, %v36, 0
    %v134 = vsel %vm120, %v37, 0
    %v137 = vsel %vm120, %v38, 0
    %v140 = vsel %vm120, %v39, 0
    %v143 = vsel %vm120, %v40, 0
    %v146 = vsel %vm120, %v41, 0
    %v149 = vsel %vm120, %v42, 0
    %151 = vmatprep.subr.mxu0 %v55
    %152 = vmatpush1.msra.mxu0 %v54
    %153 = vmatprep.subr.mxu0 %v57
    %154 = vmatpush1.msra.mxu0 %v56
    %155 = vmatprep.subr.mxu0 %v59
    %156 = vmatpush1.msra.mxu0 %v58
    %157 = vmatprep.subr.mxu0 %v61
    %158 = vmatpush1.msra.mxu0 %v60
    %159 = vmatprep.subr.mxu0 %v63
    %160 = vmatpush1.msra.mxu0 %v62
    %161 = vmatprep.subr.mxu0 %v65
    %162 = vmatpush1.msra.mxu0 %v64
    %163 = vmatprep.subr.mxu0 %v67
    %164 = vmatpush1.msra.mxu0 %v66
    %165 = vmatprep.subr.mxu0 %v69
    %166 = vmatpush1.msra.mxu0 %v68
    %167 = vmatprep.subr.mxu0 0.0
    %168 = vmatpush1.msra.mxu0 0.0
    %169 = vmatprep.subr.mxu0 0.0
    %170 = vmatpush1.msra.mxu0 0.0
    %171 = vmatprep.subr.mxu0 0.0
    %172 = vmatpush1.msra.mxu0 0.0
    %173 = vmatprep.subr.mxu0 0.0
    %174 = vmatpush1.msra.mxu0 0.0
    %175 = vmatprep.subr.mxu0 0.0
    %176 = vmatpush1.msra.mxu0 0.0
    %177 = vmatprep.subr.mxu0 0.0
    %178 = vmatpush1.msra.mxu0 0.0
    %179 = vmatprep.subr.mxu0 0.0
    %180 = vmatpush1.msra.mxu0 0.0
    %181 = vmatprep.subr.mxu0 0.0
    %182 = vmatpush1.msra.mxu0 0.0
    %183 = vmatprep.subr.mxu0 0.0
    %184 = vmatpush1.msra.mxu0 0.0
    %185 = vmatprep.subr.mxu0 0.0
    %186 = vmatpush1.msra.mxu0 0.0
    %187 = vmatprep.subr.mxu0 0.0
    %188 = vmatpush1.msra.mxu0 0.0
    %189 = vmatprep.subr.mxu0 0.0
    %190 = vmatpush1.msra.mxu0 0.0
    %191 = vmatprep.subr.mxu0 0.0
    %192 = vmatpush1.msra.mxu0 0.0
    %193 = vmatprep.subr.mxu0 0.0
    %194 = vmatpush1.msra.mxu0 0.0
    %195 = vmatprep.subr.mxu0 0.0
    %196 = vmatpush1.msra.mxu0 0.0
    %197 = vmatprep.subr.mxu0 0.0
    %198 = vmatpush1.msra.mxu0 0.0
    %199 = vmatprep.subr.mxu0 0.0
    %200 = vmatpush1.msra.mxu0 0.0
    %201 = vmatprep.subr.mxu0 0.0
    %202 = vmatpush1.msra.mxu0 0.0
    %203 = vmatprep.subr.mxu0 0.0
    %204 = vmatpush1.msra.mxu0 0.0
    %205 = vmatprep.subr.mxu0 0.0
    %206 = vmatpush1.msra.mxu0 0.0
    %207 = vmatprep.subr.mxu0 0.0
    %208 = vmatpush1.msra.mxu0 0.0
    %209 = vmatprep.subr.mxu0 0.0
    %210 = vmatpush1.msra.mxu0 0.0
    %211 = vmatprep.subr.mxu0 0.0
    %212 = vmatpush1.msra.mxu0 0.0
    %213 = vmatprep.subr.mxu0 0.0
    %214 = vmatpush1.msra.mxu0 0.0
    %215 = vmatprep.mubr.f32.mxu0 0.0
    %216 = vmatmul.mubr.f32.gmra.mrb[0].mxu0 %v122
    %v217 = vpop.f32.mrb[0].mxu0
    %v218 = vadd.f32 %v73, %v217
    %v219 = vpop.f32.mrb[0].mxu0
    %v220 = vadd.f32 %v73, %v219
    %221 = vmatprep.mubr.f32.mxu0 0.0
    %222 = vmatmul.mubr.f32.gmra.mrb[0].mxu0 %v125
    %v223 = vpop.f32.mrb[0].mxu0
    %v224 = vadd.f32 %v78, %v223
    %v225 = vpop.f32.mrb[0].mxu0
    %v226 = vadd.f32 %v78, %v225
    %227 = vmatprep.mubr.f32.mxu0 0.0
    %228 = vmatmul.mubr.f32.gmra.mrb[0].mxu0 %v128
    %v229 = vpop.f32.mrb[0].mxu0
    %v230 = vadd.f32 %v83, %v229
    %v231 = vpop.f32.mrb[0].mxu0
    %v232 = vadd.f32 %v83, %v231
    %233 = vmatprep.mubr.f32.mxu0 0.0
    %234 = vmatmul.mubr.f32.gmra.mrb[0].mxu0 %v131
    %v235 = vpop.f32.mrb[0].mxu0
    %v236 = vadd.f32 %v88, %v235
    %v237 = vpop.f32.mrb[0].mxu0
    %v238 = vadd.f32 %v88, %v237
    %239 = vmatprep.mubr.f32.mxu0 0.0
    %240 = vmatmul.mubr.f32.gmra.mrb[0].mxu0 %v134
    %v241 = vpop.f32.mrb[0].mxu0
    %v242 = vadd.f32 %v93, %v241
    %v243 = vpop.f32.mrb[0].mxu0
    %v244 = vadd.f32 %v93, %v243
    %245 = vmatprep.mubr.f32.mxu0 0.0
    %246 = vmatmul.mubr.f32.gmra.mrb[0].mxu0 %v137
    %v247 = vpop.f32.mrb[0].mxu0
    %v248 = vadd.f32 %v98, %v247
    %v249 = vpop.f32.mrb[0].mxu0
    %v250 = vadd.f32 %v98, %v249
    %251 = vmatprep.mubr.f32.mxu0 0.0
    %252 = vmatmul.mubr.f32.gmra.mrb[0].mxu0 %v140
    %v253 = vpop.f32.mrb[0].mxu0
    %v254 = vadd.f32 %v103, %v253
    %v255 = vpop.f32.mrb[0].mxu0
    %v256 = vadd.f32 %v103, %v255
    %257 = vmatprep.mubr.f32.mxu0 0.0
    %258 = vmatmul.mubr.f32.gmra.mrb[0].mxu0 %v143
    %v259 = vpop.f32.mrb[0].mxu0
    %v260 = vadd.f32 %v108, %v259
    %v261 = vpop.f32.mrb[0].mxu0
    %v262 = vadd.f32 %v108, %v261
    %263 = vmatprep.mubr.f32.mxu0 0.0
    %264 = vmatmul.mubr.f32.gmra.mrb[0].mxu0 %v146
    %v265 = vpop.f32.mrb[0].mxu0
    %v266 = vadd.f32 %v113, %v265
    %v267 = vpop.f32.mrb[0].mxu0
    %v268 = vadd.f32 %v113, %v267
    %269 = vmatprep.mubr.f32.mxu0 0.0
    %270 = vmatmul.mubr.f32.gmra.mrb[0].mxu0 %v149
    %v271 = vpop.f32.mrb[0].mxu0
    %v272 = vadd.f32 %v118, %v271
    %v273 = vpop.f32.mrb[0].mxu0
    %v274 = vadd.f32 %v118, %v273
    %275 = vdwg.mxu0
    %276 = vxpose.xlu0.b32.start [1/16] %v224, 128
    %277 = vxpose.xlu0.b32.cont [2/16] 0.0, 128
    %278 = vxpose.xlu0.b32.cont [3/16] 0.0, 128
    %279 = vxpose.xlu0.b32.cont [4/16] 0.0, 128
    %280 = vxpose.xlu0.b32.cont [5/16] 0.0, 128
    %281 = vxpose.xlu0.b32.cont [6/16] 0.0, 128
    %282 = vxpose.xlu0.b32.cont [7/16] 0.0, 128
    %283 = vxpose.xlu0.b32.cont [8/16] 0.0, 128
    %284 = vxpose.xlu0.b32.cont [9/16] 0.0, 128
    %285 = vxpose.xlu0.b32.cont [10/16] 0.0, 128
    %286 = vxpose.xlu0.b32.cont [11/16] 0.0, 128
    %287 = vxpose.xlu0.b32.cont [12/16] 0.0, 128
    %288 = vxpose.xlu0.b32.cont [13/16] 0.0, 128
    %289 = vxpose.xlu0.b32.cont [14/16] 0.0, 128
    %290 = vxpose.xlu0.b32.cont [15/16] 0.0, 128
    %291 = vxpose.xlu0.b32.end [16/16] 0.0, 128
    %v292 = vpop.trf.xlu0
    %v293 = vpop.trf.xlu0
    %v294 = vpop.trf.xlu0
    %v295 = vpop.trf.xlu0
    %v296 = vpop.trf.xlu0
    %v297 = vpop.trf.xlu0
    %v298 = vpop.trf.xlu0
    %v299 = vpop.trf.xlu0
    %v300 = vpop.trf.xlu0
    %v301 = vpop.trf.xlu0
    %v302 = vpop.trf.xlu0
    %v303 = vpop.trf.xlu0
    %v304 = vpop.trf.xlu0
    %v305 = vpop.trf.xlu0
    %v306 = vpop.trf.xlu0
    %v307 = vpop.trf.xlu0
    %308 = vxpose.xlu0.b32.start [1/16] %v226, 128
    %309 = vxpose.xlu0.b32.cont [2/16] 0.0, 128
    %310 = vxpose.xlu0.b32.cont [3/16] 0.0, 128
    %311 = vxpose.xlu0.b32.cont [4/16] 0.0, 128
    %312 = vxpose.xlu0.b32.cont [5/16] 0.0, 128
    %313 = vxpose.xlu0.b32.cont [6/16] 0.0, 128
    %314 = vxpose.xlu0.b32.cont [7/16] 0.0, 128
    %315 = vxpose.xlu0.b32.cont [8/16] 0.0, 128
    %316 = vxpose.xlu0.b32.cont [9/16] 0.0, 128
    %317 = vxpose.xlu0.b32.cont [10/16] 0.0, 128
    %318 = vxpose.xlu0.b32.cont [11/16] 0.0, 128
    %319 = vxpose.xlu0.b32.cont [12/16] 0.0, 128
    %320 = vxpose.xlu0.b32.cont [13/16] 0.0, 128
    %321 = vxpose.xlu0.b32.cont [14/16] 0.0, 128
    %322 = vxpose.xlu0.b32.cont [15/16] 0.0, 128
    %323 = vxpose.xlu0.b32.end [16/16] 0.0, 128
    %v324 = vpop.trf.xlu0
    %v325 = vpop.trf.xlu0
    %v326 = vpop.trf.xlu0
    %v327 = vpop.trf.xlu0
    %v328 = vpop.trf.xlu0
    %v329 = vpop.trf.xlu0
    %v330 = vpop.trf.xlu0
    %v331 = vpop.trf.xlu0
    %v332 = vpop.trf.xlu0
    %v333 = vpop.trf.xlu0
    %v334 = vpop.trf.xlu0
    %v335 = vpop.trf.xlu0
    %v336 = vpop.trf.xlu0
    %v337 = vpop.trf.xlu0
    %v338 = vpop.trf.xlu0
    %v339 = vpop.trf.xlu0
    %vm340 = vcmask 64512
    %v342 = vsel %vm340, %v292, 0
    %v345 = vsel %vm340, %v293, 0
    %v348 = vsel %vm340, %v294, 0
    %v351 = vsel %vm340, %v295, 0
    %v354 = vsel %vm340, %v296, 0
    %v357 = vsel %vm340, %v297, 0
    %v360 = vsel %vm340, %v298, 0
    %v363 = vsel %vm340, %v299, 0
    %v366 = vsel %vm340, %v300, 0
    %v369 = vsel %vm340, %v301, 0
    %v372 = vsel %vm340, %v302, 0
    %v375 = vsel %vm340, %v303, 0
    %v378 = vsel %vm340, %v304, 0
    %v381 = vsel %vm340, %v305, 0
    %v384 = vsel %vm340, %v306, 0
    %v387 = vsel %vm340, %v307, 0
    %v390 = vsel %vm340, %v324, 0
    %v393 = vsel %vm340, %v325, 0
    %v396 = vsel %vm340, %v326, 0
    %v399 = vsel %vm340, %v327, 0
    %v402 = vsel %vm340, %v328, 0
    %v405 = vsel %vm340, %v329, 0
    %v408 = vsel %vm340, %v330, 0
    %v411 = vsel %vm340, %v331, 0
    %v414 = vsel %vm340, %v332, 0
    %v417 = vsel %vm340, %v333, 0
    %v420 = vsel %vm340, %v334, 0
    %v423 = vsel %vm340, %v335, 0
    %v426 = vsel %vm340, %v336, 0
    %v429 = vsel %vm340, %v337, 0
    %v432 = vsel %vm340, %v338, 0
    %v435 = vsel %vm340, %v339, 0
    %437 = vmatprep.subr.mxu0 %v220
    %438 = vmatpush1.msra.mxu0 %v218
    %439 = vmatprep.subr.mxu0 0.0
    %440 = vmatpush1.msra.mxu0 0.0
    %441 = vmatprep.subr.mxu0 0.0
    %442 = vmatpush1.msra.mxu0 0.0
    %443 = vmatprep.subr.mxu0 0.0
    %444 = vmatpush1.msra.mxu0 0.0
    %445 = vmatprep.subr.mxu0 0.0
    %446 = vmatpush1.msra.mxu0 0.0
    %447 = vmatprep.subr.mxu0 0.0
    %448 = vmatpush1.msra.mxu0 0.0
    %449 = vmatprep.subr.mxu0 0.0
    %450 = vmatpush1.msra.mxu0 0.0
    %451 = vmatprep.subr.mxu0 0.0
    %452 = vmatpush1.msra.mxu0 0.0
    %453 = vmatprep.subr.mxu0 0.0
    %454 = vmatpush1.msra.mxu0 0.0
    %455 = vmatprep.subr.mxu0 0.0
    %456 = vmatpush1.msra.mxu0 0.0
    %457 = vmatprep.subr.mxu0 0.0
    %458 = vmatpush1.msra.mxu0 0.0
    %459 = vmatprep.subr.mxu0 0.0
    %460 = vmatpush1.msra.mxu0 0.0
    %461 = vmatprep.subr.mxu0 0.0
    %462 = vmatpush1.msra.mxu0 0.0
    %463 = vmatprep.subr.mxu0 0.0
    %464 = vmatpush1.msra.mxu0 0.0
    %465 = vmatprep.subr.mxu0 0.0
    %466 = vmatpush1.msra.mxu0 0.0
    %467 = vmatprep.subr.mxu0 0.0
    %468 = vmatpush1.msra.mxu0 0.0
    %469 = vmatprep.subr.mxu0 0.0
    %470 = vmatpush1.msra.mxu0 0.0
    %471 = vmatprep.subr.mxu0 0.0
    %472 = vmatpush1.msra.mxu0 0.0
    %473 = vmatprep.subr.mxu0 0.0
    %474 = vmatpush1.msra.mxu0 0.0
    %475 = vmatprep.subr.mxu0 0.0
    %476 = vmatpush1.msra.mxu0 0.0
    %477 = vmatprep.subr.mxu0 0.0
    %478 = vmatpush1.msra.mxu0 0.0
    %479 = vmatprep.subr.mxu0 0.0
    %480 = vmatpush1.msra.mxu0 0.0
    %481 = vmatprep.subr.mxu0 0.0
    %482 = vmatpush1.msra.mxu0 0.0
    %483 = vmatprep.subr.mxu0 0.0
    %484 = vmatpush1.msra.mxu0 0.0
    %485 = vmatprep.subr.mxu0 0.0
    %486 = vmatpush1.msra.mxu0 0.0
    %487 = vmatprep.subr.mxu0 0.0
    %488 = vmatpush1.msra.mxu0 0.0
    %489 = vmatprep.subr.mxu0 0.0
    %490 = vmatpush1.msra.mxu0 0.0
    %491 = vmatprep.subr.mxu0 0.0
    %492 = vmatpush1.msra.mxu0 0.0
    %493 = vmatprep.subr.mxu0 0.0
    %494 = vmatpush1.msra.mxu0 0.0
    %495 = vmatprep.subr.mxu0 0.0
    %496 = vmatpush1.msra.mxu0 0.0
    %497 = vmatprep.subr.mxu0 0.0
    %498 = vmatpush1.msra.mxu0 0.0
    %499 = vmatprep.subr.mxu0 0.0
    %500 = vmatpush1.msra.mxu0 0.0
    %501 = vmatprep.mubr.f32.mxu0 0.0
    %502 = vmatmul.mubr.f32.gmra.mrb[0].mxu0 %v342
    %v503 = vpop.f32.mrb[0].mxu0
    %v504 = vadd.f32 0.0, %v503
    %v505 = vpop.f32.mrb[0].mxu0
    %v506 = vadd.f32 0.0, %v505
    %507 = vmatprep.mubr.f32.mxu0 0.0
    %508 = vmatmul.mubr.f32.gmra.mrb[0].mxu0 %v345
    %v509 = vpop.f32.mrb[0].mxu0
    %v510 = vadd.f32 0.0, %v509
    %v511 = vpop.f32.mrb[0].mxu0
    %v512 = vadd.f32 0.0, %v511
    %513 = vmatprep.mubr.f32.mxu0 0.0
    %514 = vmatmul.mubr.f32.gmra.mrb[0].mxu0 %v348
    %v515 = vpop.f32.mrb[0].mxu0
    %v516 = vadd.f32 0.0, %v515
    %v517 = vpop.f32.mrb[0].mxu0
    %v518 = vadd.f32 0.0, %v517
    %519 = vmatprep.mubr.f32.mxu0 0.0
    %520 = vmatmul.mubr.f32.gmra.mrb[0].mxu0 %v351
    %v521 = vpop.f32.mrb[0].mxu0
    %v522 = vadd.f32 0.0, %v521
    %v523 = vpop.f32.mrb[0].mxu0
    %v524 = vadd.f32 0.0, %v523
    %525 = vmatprep.mubr.f32.mxu0 0.0
    %526 = vmatmul.mubr.f32.gmra.mrb[0].mxu0 %v354
    %v527 = vpop.f32.mrb[0].mxu0
    %v528 = vadd.f32 0.0, %v527
    %v529 = vpop.f32.mrb[0].mxu0
    %v530 = vadd.f32 0.0, %v529
    %531 = vmatprep.mubr.f32.mxu0 0.0
    %532 = vmatmul.mubr.f32.gmra.mrb[0].mxu0 %v357
    %v533 = vpop.f32.mrb[0].mxu0
    %v534 = vadd.f32 0.0, %v533
    %v535 = vpop.f32.mrb[0].mxu0
    %v536 = vadd.f32 0.0, %v535
    %537 = vmatprep.mubr.f32.mxu0 0.0
    %538 = vmatmul.mubr.f32.gmra.mrb[0].mxu0 %v360
    %v539 = vpop.f32.mrb[0].mxu0
    %v540 = vadd.f32 0.0, %v539
    %v541 = vpop.f32.mrb[0].mxu0
    %v542 = vadd.f32 0.0, %v541
    %543 = vmatprep.mubr.f32.mxu0 0.0
    %544 = vmatmul.mubr.f32.gmra.mrb[0].mxu0 %v363
    %v545 = vpop.f32.mrb[0].mxu0
    %v546 = vadd.f32 0.0, %v545
    %v547 = vpop.f32.mrb[0].mxu0
    %v548 = vadd.f32 0.0, %v547
    %549 = vmatprep.mubr.f32.mxu0 0.0
    %550 = vmatmul.mubr.f32.gmra.mrb[0].mxu0 %v366
    %v551 = vpop.f32.mrb[0].mxu0
    %v552 = vadd.f32 0.0, %v551
    %v553 = vpop.f32.mrb[0].mxu0
    %v554 = vadd.f32 0.0, %v553
    %555 = vmatprep.mubr.f32.mxu0 0.0
    %556 = vmatmul.mubr.f32.gmra.mrb[0].mxu0 %v369
    %v557 = vpop.f32.mrb[0].mxu0
    %v558 = vadd.f32 0.0, %v557
    %v559 = vpop.f32.mrb[0].mxu0
    %v560 = vadd.f32 0.0, %v559
    %561 = vmatprep.mubr.f32.mxu0 0.0
    %562 = vmatmul.mubr.f32.gmra.mrb[0].mxu0 %v372
    %v563 = vpop.f32.mrb[0].mxu0
    %v564 = vadd.f32 0.0, %v563
    %v565 = vpop.f32.mrb[0].mxu0
    %v566 = vadd.f32 0.0, %v565
    %567 = vmatprep.mubr.f32.mxu0 0.0
    %568 = vmatmul.mubr.f32.gmra.mrb[0].mxu0 %v375
    %v569 = vpop.f32.mrb[0].mxu0
    %v570 = vadd.f32 0.0, %v569
    %v571 = vpop.f32.mrb[0].mxu0
    %v572 = vadd.f32 0.0, %v571
    %573 = vmatprep.mubr.f32.mxu0 0.0
    %574 = vmatmul.mubr.f32.gmra.mrb[0].mxu0 %v378
    %v575 = vpop.f32.mrb[0].mxu0
    %v576 = vadd.f32 0.0, %v575
    %v577 = vpop.f32.mrb[0].mxu0
    %v578 = vadd.f32 0.0, %v577
    %579 = vmatprep.mubr.f32.mxu0 0.0
    %580 = vmatmul.mubr.f32.gmra.mrb[0].mxu0 %v381
    %v581 = vpop.f32.mrb[0].mxu0
    %v582 = vadd.f32 0.0, %v581
    %v583 = vpop.f32.mrb[0].mxu0
    %v584 = vadd.f32 0.0, %v583
    %585 = vmatprep.mubr.f32.mxu0 0.0
    %586 = vmatmul.mubr.f32.gmra.mrb[0].mxu0 %v384
    %v587 = vpop.f32.mrb[0].mxu0
    %v588 = vadd.f32 0.0, %v587
    %v589 = vpop.f32.mrb[0].mxu0
    %v590 = vadd.f32 0.0, %v589
    %591 = vmatprep.mubr.f32.mxu0 0.0
    %592 = vmatmul.mubr.f32.gmra.mrb[0].mxu0 %v387
    %v593 = vpop.f32.mrb[0].mxu0
    %v594 = vadd.f32 0.0, %v593
    %v595 = vpop.f32.mrb[0].mxu0
    %v596 = vadd.f32 0.0, %v595
    %597 = vmatprep.mubr.f32.mxu0 0.0
    %598 = vmatmul.mubr.f32.gmra.mrb[0].mxu0 %v390
    %v599 = vpop.f32.mrb[0].mxu0
    %v600 = vadd.f32 0.0, %v599
    %v601 = vpop.f32.mrb[0].mxu0
    %v602 = vadd.f32 0.0, %v601
    %603 = vmatprep.mubr.f32.mxu0 0.0
    %604 = vmatmul.mubr.f32.gmra.mrb[0].mxu0 %v393
    %v605 = vpop.f32.mrb[0].mxu0
    %v606 = vadd.f32 0.0, %v605
    %v607 = vpop.f32.mrb[0].mxu0
    %v608 = vadd.f32 0.0, %v607
    %609 = vmatprep.mubr.f32.mxu0 0.0
    %610 = vmatmul.mubr.f32.gmra.mrb[0].mxu0 %v396
    %v611 = vpop.f32.mrb[0].mxu0
    %v612 = vadd.f32 0.0, %v611
    %v613 = vpop.f32.mrb[0].mxu0
    %v614 = vadd.f32 0.0, %v613
    %615 = vmatprep.mubr.f32.mxu0 0.0
    %616 = vmatmul.mubr.f32.gmra.mrb[0].mxu0 %v399
    %v617 = vpop.f32.mrb[0].mxu0
    %v618 = vadd.f32 0.0, %v617
    %v619 = vpop.f32.mrb[0].mxu0
    %v620 = vadd.f32 0.0, %v619
    %621 = vmatprep.mubr.f32.mxu0 0.0
    %622 = vmatmul.mubr.f32.gmra.mrb[0].mxu0 %v402
    %v623 = vpop.f32.mrb[0].mxu0
    %v624 = vadd.f32 0.0, %v623
    %v625 = vpop.f32.mrb[0].mxu0
    %v626 = vadd.f32 0.0, %v625
    %627 = vmatprep.mubr.f32.mxu0 0.0
    %628 = vmatmul.mubr.f32.gmra.mrb[0].mxu0 %v405
    %v629 = vpop.f32.mrb[0].mxu0
    %v630 = vadd.f32 0.0, %v629
    %v631 = vpop.f32.mrb[0].mxu0
    %v632 = vadd.f32 0.0, %v631
    %633 = vmatprep.mubr.f32.mxu0 0.0
    %634 = vmatmul.mubr.f32.gmra.mrb[0].mxu0 %v408
    %v635 = vpop.f32.mrb[0].mxu0
    %v636 = vadd.f32 0.0, %v635
    %v637 = vpop.f32.mrb[0].mxu0
    %v638 = vadd.f32 0.0, %v637
    %639 = vmatprep.mubr.f32.mxu0 0.0
    %640 = vmatmul.mubr.f32.gmra.mrb[0].mxu0 %v411
    %v641 = vpop.f32.mrb[0].mxu0
    %v642 = vadd.f32 0.0, %v641
    %v643 = vpop.f32.mrb[0].mxu0
    %v644 = vadd.f32 0.0, %v643
    %645 = vmatprep.mubr.f32.mxu0 0.0
    %646 = vmatmul.mubr.f32.gmra.mrb[0].mxu0 %v414
    %v647 = vpop.f32.mrb[0].mxu0
    %v648 = vadd.f32 0.0, %v647
    %v649 = vpop.f32.mrb[0].mxu0
    %v650 = vadd.f32 0.0, %v649
    %651 = vmatprep.mubr.f32.mxu0 0.0
    %652 = vmatmul.mubr.f32.gmra.mrb[0].mxu0 %v417
    %v653 = vpop.f32.mrb[0].mxu0
    %v654 = vadd.f32 0.0, %v653
    %v655 = vpop.f32.mrb[0].mxu0
    %v656 = vadd.f32 0.0, %v655
    %657 = vmatprep.mubr.f32.mxu0 0.0
    %658 = vmatmul.mubr.f32.gmra.mrb[0].mxu0 %v420
    %v659 = vpop.f32.mrb[0].mxu0
    %v660 = vadd.f32 0.0, %v659
    %v661 = vpop.f32.mrb[0].mxu0
    %v662 = vadd.f32 0.0, %v661
    %663 = vmatprep.mubr.f32.mxu0 0.0
    %664 = vmatmul.mubr.f32.gmra.mrb[0].mxu0 %v423
    %v665 = vpop.f32.mrb[0].mxu0
    %v666 = vadd.f32 0.0, %v665
    %v667 = vpop.f32.mrb[0].mxu0
    %v668 = vadd.f32 0.0, %v667
    %669 = vmatprep.mubr.f32.mxu0 0.0
    %670 = vmatmul.mubr.f32.gmra.mrb[0].mxu0 %v426
    %v671 = vpop.f32.mrb[0].mxu0
    %v672 = vadd.f32 0.0, %v671
    %v673 = vpop.f32.mrb[0].mxu0
    %v674 = vadd.f32 0.0, %v673
    %675 = vmatprep.mubr.f32.mxu0 0.0
    %676 = vmatmul.mubr.f32.gmra.mrb[0].mxu0 %v429
    %v677 = vpop.f32.mrb[0].mxu0
    %v678 = vadd.f32 0.0, %v677
    %v679 = vpop.f32.mrb[0].mxu0
    %v680 = vadd.f32 0.0, %v679
    %681 = vmatprep.mubr.f32.mxu0 0.0
    %682 = vmatmul.mubr.f32.gmra.mrb[0].mxu0 %v432
    %v683 = vpop.f32.mrb[0].mxu0
    %v684 = vadd.f32 0.0, %v683
    %v685 = vpop.f32.mrb[0].mxu0
    %v686 = vadd.f32 0.0, %v685
    %687 = vmatprep.mubr.f32.mxu0 0.0
    %688 = vmatmul.mubr.f32.gmra.mrb[0].mxu0 %v435
    %v689 = vpop.f32.mrb[0].mxu0
    %v690 = vadd.f32 0.0, %v689
    %v691 = vpop.f32.mrb[0].mxu0
    %v692 = vadd.f32 0.0, %v691
    %693 = vdwg.mxu0
    %v694 = vmax.f32 %v504, %v516
    %v695 = vmax.f32 %v510, %v522
    %v696 = vmax.f32 %v694, %v528
    %v697 = vmax.f32 %v695, %v534
    %v698 = vmax.f32 %v696, %v540
    %v699 = vmax.f32 %v697, %v546
    %v700 = vmax.f32 %v698, %v552
    %v701 = vmax.f32 %v699, %v558
    %v702 = vmax.f32 %v700, %v564
    %v703 = vmax.f32 %v701, %v570
    %v704 = vmax.f32 %v702, %v576
    %v705 = vmax.f32 %v703, %v582
    %v706 = vmax.f32 %v704, %v588
    %v707 = vmax.f32 %v705, %v594
    %v708 = vmax.f32 %v706, %v600
    %v709 = vmax.f32 %v707, %v606
    %v710 = vmax.f32 %v708, %v612
    %v711 = vmax.f32 %v709, %v618
    %v712 = vmax.f32 %v710, %v624
    %v713 = vmax.f32 %v711, %v630
    %v714 = vmax.f32 %v712, %v636
    %v715 = vmax.f32 %v713, %v642
    %v716 = vmax.f32 %v714, %v648
    %v717 = vmax.f32 %v715, %v654
    %v718 = vmax.f32 %v716, %v660
    %v719 = vmax.f32 %v717, %v666
    %v720 = vmax.f32 %v718, %v672
    %v721 = vmax.f32 %v719, %v678
    %v722 = vmax.f32 %v720, %v684
    %v723 = vmax.f32 %v721, %v690
    %v724 = vmax.f32 %v722, %v723
    %v725 = vrot.slane %v724, 4
    %v726 = vmax.f32 %v724, %v725
    %v727 = vrot.slane %v726, 2
    %v728 = vmax.f32 %v726, %v727
    %v729 = vrot.slane %v728, 1
    %v730 = vmax.f32 %v728, %v729
    %v731 = vmax.f32 %v506, %v518
    %v732 = vmax.f32 %v512, %v524
    %v733 = vmax.f32 %v731, %v530
    %v734 = vmax.f32 %v732, %v536
    %v735 = vmax.f32 %v733, %v542
    %v736 = vmax.f32 %v734, %v548
    %v737 = vmax.f32 %v735, %v554
    %v738 = vmax.f32 %v736, %v560
    %v739 = vmax.f32 %v737, %v566
    %v740 = vmax.f32 %v738, %v572
    %v741 = vmax.f32 %v739, %v578
    %v742 = vmax.f32 %v740, %v584
    %v743 = vmax.f32 %v741, %v590
    %v744 = vmax.f32 %v742, %v596
    %v745 = vmax.f32 %v743, %v602
    %v746 = vmax.f32 %v744, %v608
    %v747 = vmax.f32 %v745, %v614
    %v748 = vmax.f32 %v746, %v620
    %v749 = vmax.f32 %v747, %v626
    %v750 = vmax.f32 %v748, %v632
    %v751 = vmax.f32 %v749, %v638
    %v752 = vmax.f32 %v750, %v644
    %v753 = vmax.f32 %v751, %v650
    %v754 = vmax.f32 %v752, %v656
    %v755 = vmax.f32 %v753, %v662
    %v756 = vmax.f32 %v754, %v668
    %v757 = vmax.f32 %v755, %v674
    %v758 = vmax.f32 %v756, %v680
    %v759 = vmax.f32 %v757, %v686
    %v760 = vmax.f32 %v758, %v692
    %v761 = vmax.f32 %v759, %v760
    %v762 = vrot.slane %v761, 4
    %v763 = vmax.f32 %v761, %v762
    %v764 = vrot.slane %v763, 2
    %v765 = vmax.f32 %v763, %v764
    %v766 = vrot.slane %v765, 1
    %v767 = vmax.f32 %v765, %v766
    %v768 = vsub.f32 %v504, %v730
    %v769 = vsub.f32 %v506, %v767
    %v770 = vsub.f32 %v510, %v730
    %v771 = vsub.f32 %v512, %v767
    %v772 = vsub.f32 %v516, %v730
    %v773 = vsub.f32 %v518, %v767
    %v774 = vsub.f32 %v522, %v730
    %v775 = vsub.f32 %v524, %v767
    %v776 = vsub.f32 %v528, %v730
    %v777 = vsub.f32 %v530, %v767
    %v778 = vsub.f32 %v534, %v730
    %v779 = vsub.f32 %v536, %v767
    %v780 = vsub.f32 %v540, %v730
    %v781 = vsub.f32 %v542, %v767
    %v782 = vsub.f32 %v546, %v730
    %v783 = vsub.f32 %v548, %v767
    %v784 = vsub.f32 %v552, %v730
    %v785 = vsub.f32 %v554, %v767
    %v786 = vsub.f32 %v558, %v730
    %v787 = vsub.f32 %v560, %v767
    %v788 = vsub.f32 %v564, %v730
    %v789 = vsub.f32 %v566, %v767
    %v790 = vsub.f32 %v570, %v730
    %v791 = vsub.f32 %v572, %v767
    %v792 = vsub.f32 %v576, %v730
    %v793 = vsub.f32 %v578, %v767
    %v794 = vsub.f32 %v582, %v730
    %v795 = vsub.f32 %v584, %v767
    %v796 = vsub.f32 %v588, %v730
    %v797 = vsub.f32 %v590, %v767
    %v798 = vsub.f32 %v594, %v730
    %v799 = vsub.f32 %v596, %v767
    %v800 = vsub.f32 %v600, %v730
    %v801 = vsub.f32 %v602, %v767
    %v802 = vsub.f32 %v606, %v730
    %v803 = vsub.f32 %v608, %v767
    %v804 = vsub.f32 %v612, %v730
    %v805 = vsub.f32 %v614, %v767
    %v806 = vsub.f32 %v618, %v730
    %v807 = vsub.f32 %v620, %v767
    %v808 = vsub.f32 %v624, %v730
    %v809 = vsub.f32 %v626, %v767
    %v810 = vsub.f32 %v630, %v730
    %v811 = vsub.f32 %v632, %v767
    %v812 = vsub.f32 %v636, %v730
    %v813 = vsub.f32 %v638, %v767
    %v814 = vsub.f32 %v642, %v730
    %v815 = vsub.f32 %v644, %v767
    %v816 = vsub.f32 %v648, %v730
    %v817 = vsub.f32 %v650, %v767
    %v818 = vsub.f32 %v654, %v730
    %v819 = vsub.f32 %v656, %v767
    %v820 = vsub.f32 %v660, %v730
    %v821 = vsub.f32 %v662, %v767
    %v822 = vsub.f32 %v666, %v730
    %v823 = vsub.f32 %v668, %v767
    %v824 = vsub.f32 %v672, %v730
    %v825 = vsub.f32 %v674, %v767
    %v826 = vsub.f32 %v678, %v730
    %v827 = vsub.f32 %v680, %v767
    %v828 = vsub.f32 %v684, %v730
    %v829 = vsub.f32 %v686, %v767
    %v830 = vsub.f32 %v690, %v730
    %v831 = vsub.f32 %v692, %v767
    %v832 = vmul.f32 %v768, 1.442695
    %v833 = vpow.pop %v832
    %v834 = vmul.f32 %v769, 1.442695
    %v835 = vpow.pop %v834
    %v836 = vmul.f32 %v770, 1.442695
    %v837 = vpow.pop %v836
    %v838 = vmul.f32 %v771, 1.442695
    %v839 = vpow.pop %v838
    %v840 = vmul.f32 %v772, 1.442695
    %v841 = vpow.pop %v840
    %v842 = vmul.f32 %v773, 1.442695
    %v843 = vpow.pop %v842
    %v844 = vmul.f32 %v774, 1.442695
    %v845 = vpow.pop %v844
    %v846 = vmul.f32 %v775, 1.442695
    %v847 = vpow.pop %v846
    %v848 = vmul.f32 %v776, 1.442695
    %v849 = vpow.pop %v848
    %v850 = vmul.f32 %v777, 1.442695
    %v851 = vpow.pop %v850
    %v852 = vmul.f32 %v778, 1.442695
    %v853 = vpow.pop %v852
    %v854 = vmul.f32 %v779, 1.442695
    %v855 = vpow.pop %v854
    %v856 = vmul.f32 %v780, 1.442695
    %v857 = vpow.pop %v856
    %v858 = vmul.f32 %v781, 1.442695
    %v859 = vpow.pop %v858
    %v860 = vmul.f32 %v782, 1.442695
    %v861 = vpow.pop %v860
    %v862 = vmul.f32 %v783, 1.442695
    %v863 = vpow.pop %v862
    %v864 = vmul.f32 %v784, 1.442695
    %v865 = vpow.pop %v864
    %v866 = vmul.f32 %v785, 1.442695
    %v867 = vpow.pop %v866
    %v868 = vmul.f32 %v786, 1.442695
    %v869 = vpow.pop %v868
    %v870 = vmul.f32 %v787, 1.442695
    %v871 = vpow.pop %v870
    %v872 = vmul.f32 %v788, 1.442695
    %v873 = vpow.pop %v872
    %v874 = vmul.f32 %v789, 1.442695
    %v875 = vpow.pop %v874
    %v876 = vmul.f32 %v790, 1.442695
    %v877 = vpow.pop %v876
    %v878 = vmul.f32 %v791, 1.442695
    %v879 = vpow.pop %v878
    %v880 = vmul.f32 %v792, 1.442695
    %v881 = vpow.pop %v880
    %v882 = vmul.f32 %v793, 1.442695
    %v883 = vpow.pop %v882
    %v884 = vmul.f32 %v794, 1.442695
    %v885 = vpow.pop %v884
    %v886 = vmul.f32 %v795, 1.442695
    %v887 = vpow.pop %v886
    %v888 = vmul.f32 %v796, 1.442695
    %v889 = vpow.pop %v888
    %v890 = vmul.f32 %v797, 1.442695
    %v891 = vpow.pop %v890
    %v892 = vmul.f32 %v798, 1.442695
    %v893 = vpow.pop %v892
    %v894 = vmul.f32 %v799, 1.442695
    %v895 = vpow.pop %v894
    %v896 = vmul.f32 %v800, 1.442695
    %v897 = vpow.pop %v896
    %v898 = vmul.f32 %v801, 1.442695
    %v899 = vpow.pop %v898
    %v900 = vmul.f32 %v802, 1.442695
    %v901 = vpow.pop %v900
    %v902 = vmul.f32 %v803, 1.442695
    %v903 = vpow.pop %v902
    %v904 = vmul.f32 %v804, 1.442695
    %v905 = vpow.pop %v904
    %v906 = vmul.f32 %v805, 1.442695
    %v907 = vpow.pop %v906
    %v908 = vmul.f32 %v806, 1.442695
    %v909 = vpow.pop %v908
    %v910 = vmul.f32 %v807, 1.442695
    %v911 = vpow.pop %v910
    %v912 = vmul.f32 %v808, 1.442695
    %v913 = vpow.pop %v912
    %v914 = vmul.f32 %v809, 1.442695
    %v915 = vpow.pop %v914
    %v916 = vmul.f32 %v810, 1.442695
    %v917 = vpow.pop %v916
    %v918 = vmul.f32 %v811, 1.442695
    %v919 = vpow.pop %v918
    %v920 = vmul.f32 %v812, 1.442695
    %v921 = vpow.pop %v920
    %v922 = vmul.f32 %v813, 1.442695
    %v923 = vpow.pop %v922
    %v924 = vmul.f32 %v814, 1.442695
    %v925 = vpow.pop %v924
    %v926 = vmul.f32 %v815, 1.442695
    %v927 = vpow.pop %v926
    %v928 = vmul.f32 %v816, 1.442695
    %v929 = vpow.pop %v928
    %v930 = vmul.f32 %v817, 1.442695
    %v931 = vpow.pop %v930
    %v932 = vmul.f32 %v818, 1.442695
    %v933 = vpow.pop %v932
    %v934 = vmul.f32 %v819, 1.442695
    %v935 = vpow.pop %v934
    %v936 = vmul.f32 %v820, 1.442695
    %v937 = vpow.pop %v936
    %v938 = vmul.f32 %v821, 1.442695
    %v939 = vpow.pop %v938
    %v940 = vmul.f32 %v822, 1.442695
    %v941 = vpow.pop %v940
    %v942 = vmul.f32 %v823, 1.442695
    %v943 = vpow.pop %v942
    %v944 = vmul.f32 %v824, 1.442695
    %v945 = vpow.pop %v944
    %v946 = vmul.f32 %v825, 1.442695
    %v947 = vpow.pop %v946
    %v948 = vmul.f32 %v826, 1.442695
    %v949 = vpow.pop %v948
    %v950 = vmul.f32 %v827, 1.442695
    %v951 = vpow.pop %v950
    %v952 = vmul.f32 %v828, 1.442695
    %v953 = vpow.pop %v952
    %v954 = vmul.f32 %v829, 1.442695
    %v955 = vpow.pop %v954
    %v956 = vmul.f32 %v830, 1.442695
    %v957 = vpow.pop %v956
    %v958 = vmul.f32 %v831, 1.442695
    %v959 = vpow.pop %v958
    %v960 = vadd.f32 %v833, %v837
    %v961 = vadd.f32 %v960, %v841
    %v962 = vadd.f32 %v961, %v845
    %v963 = vadd.f32 %v962, %v849
    %v964 = vadd.f32 %v963, %v853
    %v965 = vadd.f32 %v964, %v857
    %v966 = vadd.f32 %v965, %v861
    %v967 = vadd.f32 %v966, %v865
    %v968 = vadd.f32 %v967, %v869
    %v969 = vadd.f32 %v968, %v873
    %v970 = vadd.f32 %v969, %v877
    %v971 = vadd.f32 %v970, %v881
    %v972 = vadd.f32 %v971, %v885
    %v973 = vadd.f32 %v972, %v889
    %v974 = vadd.f32 %v973, %v893
    %v975 = vadd.f32 %v974, %v897
    %v976 = vadd.f32 %v975, %v901
    %v977 = vadd.f32 %v976, %v905
    %v978 = vadd.f32 %v977, %v909
    %v979 = vadd.f32 %v978, %v913
    %v980 = vadd.f32 %v979, %v917
    %v981 = vadd.f32 %v980, %v921
    %v982 = vadd.f32 %v981, %v925
    %v983 = vadd.f32 %v982, %v929
    %v984 = vadd.f32 %v983, %v933
    %v985 = vadd.f32 %v984, %v937
    %v986 = vadd.f32 %v985, %v941
    %v987 = vadd.f32 %v986, %v945
    %v988 = vadd.f32 %v987, %v949
    %v989 = vadd.f32 %v988, %v953
    %v990 = vadd.f32 %v989, %v957
    %v991 = vrot.slane %v990, 4
    %v992 = vadd.f32 %v990, %v991
    %v993 = vrot.slane %v992, 2
    %v994 = vadd.f32 %v992, %v993
    %v995 = vrot.slane %v994, 1
    %v996 = vadd.f32 %v994, %v995
    %v997 = vadd.f32 %v835, %v839
    %v998 = vadd.f32 %v997, %v843
    %v999 = vadd.f32 %v998, %v847
    %v1000 = vadd.f32 %v999, %v851
    %v1001 = vadd.f32 %v1000, %v855
    %v1002 = vadd.f32 %v1001, %v859
    %v1003 = vadd.f32 %v1002, %v863
    %v1004 = vadd.f32 %v1003, %v867
    %v1005 = vadd.f32 %v1004, %v871
    %v1006 = vadd.f32 %v1005, %v875
    %v1007 = vadd.f32 %v1006, %v879
    %v1008 = vadd.f32 %v1007, %v883
    %v1009 = vadd.f32 %v1008, %v887
    %v1010 = vadd.f32 %v1009, %v891
    %v1011 = vadd.f32 %v1010, %v895
    %v1012 = vadd.f32 %v1011, %v899
    %v1013 = vadd.f32 %v1012, %v903
    %v1014 = vadd.f32 %v1013, %v907
    %v1015 = vadd.f32 %v1014, %v911
    %v1016 = vadd.f32 %v1015, %v915
    %v1017 = vadd.f32 %v1016, %v919
    %v1018 = vadd.f32 %v1017, %v923
    %v1019 = vadd.f32 %v1018, %v927
    %v1020 = vadd.f32 %v1019, %v931
    %v1021 = vadd.f32 %v1020, %v935
    %v1022 = vadd.f32 %v1021, %v939
    %v1023 = vadd.f32 %v1022, %v943
    %v1024 = vadd.f32 %v1023, %v947
    %v1025 = vadd.f32 %v1024, %v951
    %v1026 = vadd.f32 %v1025, %v955
    %v1027 = vadd.f32 %v1026, %v959
    %v1028 = vrot.slane %v1027, 4
    %v1029 = vadd.f32 %v1027, %v1028
    %v1030 = vrot.slane %v1029, 2
    %v1031 = vadd.f32 %v1029, %v1030
    %v1032 = vrot.slane %v1031, 1
    %v1033 = vadd.f32 %v1031, %v1032
    %v1034 = vrcp.pop %v996
    %v1035 = vrcp.pop %v1033
    %v1036 = vmul.f32 %v996, %v1034
    %v1037 = vmul.f32 %v1033, %v1035
    %v1038 = vsub.f32 2.0, %v1036
    %v1039 = vsub.f32 2.0, %v1037
    %v1040 = vmul.f32 %v1034, %v1038
    %v1041 = vmul.f32 %v1035, %v1039
    %1042 = vmatprep.subr.mxu0 %v835
    %1043 = vmatpush1.msra.mxu0 %v833
    %1044 = vmatprep.subr.mxu0 %v839
    %1045 = vmatpush1.msra.mxu0 %v837
    %1046 = vmatprep.subr.mxu0 %v843
    %1047 = vmatpush1.msra.mxu0 %v841
    %1048 = vmatprep.subr.mxu0 %v847
    %1049 = vmatpush1.msra.mxu0 %v845
    %1050 = vmatprep.subr.mxu0 %v851
    %1051 = vmatpush1.msra.mxu0 %v849
    %1052 = vmatprep.subr.mxu0 %v855
    %1053 = vmatpush1.msra.mxu0 %v853
    %1054 = vmatprep.subr.mxu0 %v859
    %1055 = vmatpush1.msra.mxu0 %v857
    %1056 = vmatprep.subr.mxu0 %v863
    %1057 = vmatpush1.msra.mxu0 %v861
    %1058 = vmatprep.subr.mxu0 %v867
    %1059 = vmatpush1.msra.mxu0 %v865
    %1060 = vmatprep.subr.mxu0 %v871
    %1061 = vmatpush1.msra.mxu0 %v869
    %1062 = vmatprep.subr.mxu0 %v875
    %1063 = vmatpush1.msra.mxu0 %v873
    %1064 = vmatprep.subr.mxu0 %v879
    %1065 = vmatpush1.msra.mxu0 %v877
    %1066 = vmatprep.subr.mxu0 %v883
    %1067 = vmatpush1.msra.mxu0 %v881
    %1068 = vmatprep.subr.mxu0 %v887
    %1069 = vmatpush1.msra.mxu0 %v885
    %1070 = vmatprep.subr.mxu0 %v891
    %1071 = vmatpush1.msra.mxu0 %v889
    %1072 = vmatprep.subr.mxu0 %v895
    %1073 = vmatpush1.msra.mxu0 %v893
    %1074 = vmatprep.subr.mxu0 %v899
    %1075 = vmatpush1.msra.mxu0 %v897
    %1076 = vmatprep.subr.mxu0 %v903
    %1077 = vmatpush1.msra.mxu0 %v901
    %1078 = vmatprep.subr.mxu0 %v907
    %1079 = vmatpush1.msra.mxu0 %v905
    %1080 = vmatprep.subr.mxu0 %v911
    %1081 = vmatpush1.msra.mxu0 %v909
    %1082 = vmatprep.subr.mxu0 %v915
    %1083 = vmatpush1.msra.mxu0 %v913
    %1084 = vmatprep.subr.mxu0 %v919
    %1085 = vmatpush1.msra.mxu0 %v917
    %1086 = vmatprep.subr.mxu0 %v923
    %1087 = vmatpush1.msra.mxu0 %v921
    %1088 = vmatprep.subr.mxu0 %v927
    %1089 = vmatpush1.msra.mxu0 %v925
    %1090 = vmatprep.subr.mxu0 %v931
    %1091 = vmatpush1.msra.mxu0 %v929
    %1092 = vmatprep.subr.mxu0 %v935
    %1093 = vmatpush1.msra.mxu0 %v933
    %1094 = vmatprep.subr.mxu0 %v939
    %1095 = vmatpush1.msra.mxu0 %v937
    %1096 = vmatprep.subr.mxu0 %v943
    %1097 = vmatpush1.msra.mxu0 %v941
    %1098 = vmatprep.subr.mxu0 %v947
    %1099 = vmatpush1.msra.mxu0 %v945
    %1100 = vmatprep.subr.mxu0 %v951
    %1101 = vmatpush1.msra.mxu0 %v949
    %1102 = vmatprep.subr.mxu0 %v955
    %1103 = vmatpush1.msra.mxu0 %v953
    %1104 = vmatprep.subr.mxu0 %v959
    %1105 = vmatpush1.msra.mxu0 %v957
    %1106 = vmatprep.mubr.f32.mxu0 %v232
    %1107 = vmatmul.mubr.f32.gmra.mrb[0].mxu0 %v230
    %v1108 = vpop.f32.mrb[0].mxu0
    %v1109 = vadd.f32 0.0, %v1108
    %v1110 = vpop.f32.mrb[0].mxu0
    %v1111 = vadd.f32 0.0, %v1110
    %1112 = vmatprep.mubr.f32.mxu0 %v238
    %1113 = vmatmul.mubr.f32.gmra.mrb[0].mxu0 %v236
    %v1114 = vpop.f32.mrb[0].mxu0
    %v1115 = vadd.f32 0.0, %v1114
    %v1116 = vpop.f32.mrb[0].mxu0
    %v1117 = vadd.f32 0.0, %v1116
    %1118 = vmatprep.mubr.f32.mxu0 %v244
    %1119 = vmatmul.mubr.f32.gmra.mrb[0].mxu0 %v242
    %v1120 = vpop.f32.mrb[0].mxu0
    %v1121 = vadd.f32 0.0, %v1120
    %v1122 = vpop.f32.mrb[0].mxu0
    %v1123 = vadd.f32 0.0, %v1122
    %1124 = vmatprep.mubr.f32.mxu0 %v250
    %1125 = vmatmul.mubr.f32.gmra.mrb[0].mxu0 %v248
    %v1126 = vpop.f32.mrb[0].mxu0
    %v1127 = vadd.f32 0.0, %v1126
    %v1128 = vpop.f32.mrb[0].mxu0
    %v1129 = vadd.f32 0.0, %v1128
    %1130 = vmatprep.mubr.f32.mxu0 %v256
    %1131 = vmatmul.mubr.f32.gmra.mrb[0].mxu0 %v254
    %v1132 = vpop.f32.mrb[0].mxu0
    %v1133 = vadd.f32 0.0, %v1132
    %v1134 = vpop.f32.mrb[0].mxu0
    %v1135 = vadd.f32 0.0, %v1134
    %1136 = vmatprep.mubr.f32.mxu0 %v262
    %1137 = vmatmul.mubr.f32.gmra.mrb[0].mxu0 %v260
    %v1138 = vpop.f32.mrb[0].mxu0
    %v1139 = vadd.f32 0.0, %v1138
    %v1140 = vpop.f32.mrb[0].mxu0
    %v1141 = vadd.f32 0.0, %v1140
    %1142 = vmatprep.mubr.f32.mxu0 %v268
    %1143 = vmatmul.mubr.f32.gmra.mrb[0].mxu0 %v266
    %v1144 = vpop.f32.mrb[0].mxu0
    %v1145 = vadd.f32 0.0, %v1144
    %v1146 = vpop.f32.mrb[0].mxu0
    %v1147 = vadd.f32 0.0, %v1146
    %1148 = vmatprep.mubr.f32.mxu0 %v274
    %1149 = vmatmul.mubr.f32.gmra.mrb[0].mxu0 %v272
    %v1150 = vpop.f32.mrb[0].mxu0
    %v1151 = vadd.f32 0.0, %v1150
    %v1152 = vpop.f32.mrb[0].mxu0
    %v1153 = vadd.f32 0.0, %v1152
    %1154 = vdwg.mxu0
    %v1155 = vstv %s53
    %v1156 = vmul.f32 %v1155, %v54
    %v1157 = vmul.f32 %v1155, %v55
    %v1158 = vmul.f32 %v1155, %v56
    %v1159 = vmul.f32 %v1155, %v57
    %v1160 = vmul.f32 %v1155, %v58
    %v1161 = vmul.f32 %v1155, %v59
    %v1162 = vmul.f32 %v1155, %v60
    %v1163 = vmul.f32 %v1155, %v61
    %v1164 = vmul.f32 %v1155, %v62
    %v1165 = vmul.f32 %v1155, %v63
    %v1166 = vmul.f32 %v1155, %v64
    %v1167 = vmul.f32 %v1155, %v65
    %v1168 = vmul.f32 %v1155, %v66
    %v1169 = vmul.f32 %v1155, %v67
    %v1170 = vmul.f32 %v1155, %v68
    %v1171 = vmul.f32 %v1155, %v69
    %v1172 = vmul.f32 %v1109, %v1040
    %v1173 = vmul.f32 %v1111, %v1041
    %v1174 = vmul.f32 %v1115, %v1040
    %v1175 = vmul.f32 %v1117, %v1041
    %v1176 = vmul.f32 %v1121, %v1040
    %v1177 = vmul.f32 %v1123, %v1041
    %v1178 = vmul.f32 %v1127, %v1040
    %v1179 = vmul.f32 %v1129, %v1041
    %v1180 = vmul.f32 %v1133, %v1040
    %v1181 = vmul.f32 %v1135, %v1041
    %v1182 = vmul.f32 %v1139, %v1040
    %v1183 = vmul.f32 %v1141, %v1041
    %v1184 = vmul.f32 %v1145, %v1040
    %v1185 = vmul.f32 %v1147, %v1041
    %v1186 = vmul.f32 %v1151, %v1040
    %v1187 = vmul.f32 %v1153, %v1041
    %v1188 = vadd.f32 %v1156, %v1172
    %v1189 = vadd.f32 %v1157, %v1173
    %v1190 = vadd.f32 %v1158, %v1174
    %v1191 = vadd.f32 %v1159, %v1175
    %v1192 = vadd.f32 %v1160, %v1176
    %v1193 = vadd.f32 %v1161, %v1177
    %v1194 = vadd.f32 %v1162, %v1178
    %v1195 = vadd.f32 %v1163, %v1179
    %v1196 = vadd.f32 %v1164, %v1180
    %v1197 = vadd.f32 %v1165, %v1181
    %v1198 = vadd.f32 %v1166, %v1182
    %v1199 = vadd.f32 %v1167, %v1183
    %v1200 = vadd.f32 %v1168, %v1184
    %v1201 = vadd.f32 %v1169, %v1185
    %v1202 = vadd.f32 %v1170, %v1186
    %v1203 = vadd.f32 %v1171, %v1187
    %1204 = vst [vmem:[#allocation6] sm:$0xff] %v1188
    %1205 = vst [vmem:[#allocation6 + $0x8] sm:$0xff] %v1189
    %1206 = vst [vmem:[#allocation6 + $0x10] sm:$0xff] %v1190
    %1207 = vst [vmem:[#allocation6 + $0x18] sm:$0xff] %v1191
    %1208 = vst [vmem:[#allocation6 + $0x20] sm:$0xff] %v1192
    %1209 = vst [vmem:[#allocation6 + $0x28] sm:$0xff] %v1193
    %1210 = vst [vmem:[#allocation6 + $0x30] sm:$0xff] %v1194
    %1211 = vst [vmem:[#allocation6 + $0x38] sm:$0xff] %v1195
    %1212 = vst [vmem:[#allocation6 + $0x40] sm:$0xff] %v1196
    %1213 = vst [vmem:[#allocation6 + $0x48] sm:$0xff] %v1197
    %1214 = vst [vmem:[#allocation6 + $0x50] sm:$0xff] %v1198
    %1215 = vst [vmem:[#allocation6 + $0x58] sm:$0xff] %v1199
    %1216 = vst [vmem:[#allocation6 + $0x60] sm:$0xff] %v1200
    %1217 = vst [vmem:[#allocation6 + $0x68] sm:$0xff] %v1201
    %1218 = vst [vmem:[#allocation6 + $0x70] sm:$0xff] %v1202
    %1219 = vst [vmem:[#allocation6 + $0x78] sm:$0xff] %v1203
    %s1220 = scalar_lea.vmem [#allocation3], 128
    %v1221 = vld [vmem:[%s1220] sm:$0xff]
    %v1222 = vld [vmem:[%s1220 + $0x8] sm:$0xff]
    %v1223 = vld [vmem:[%s1220 + $0x10] sm:$0xff]
    %v1224 = vld [vmem:[%s1220 + $0x18] sm:$0xff]
    %v1225 = vld [vmem:[%s1220 + $0x20] sm:$0xff]
    %v1226 = vld [vmem:[%s1220 + $0x28] sm:$0xff]
    %v1227 = vld [vmem:[%s1220 + $0x30] sm:$0xff]
    %v1228 = vld [vmem:[%s1220 + $0x38] sm:$0xff]
    %v1229 = vld [vmem:[%s1220 + $0x40] sm:$0xff]
    %v1230 = vld [vmem:[%s1220 + $0x48] sm:$0xff]
    %v1231 = vld [vmem:[%s1220 + $0x50] sm:$0xff]
    %v1232 = vld [vmem:[%s1220 + $0x58] sm:$0xff]
    %v1233 = vld [vmem:[%s1220 + $0x60] sm:$0xff]
    %v1234 = vld [vmem:[%s1220 + $0x68] sm:$0xff]
    %v1235 = vld [vmem:[%s1220 + $0x70] sm:$0xff]
    %v1236 = vld [vmem:[%s1220 + $0x78] sm:$0xff]
    %1237 = vmatprep.subr.mxu0 %v1222
    %1238 = vmatpush1.msra.mxu0 %v1221
    %1239 = vmatprep.subr.mxu0 %v1224
    %1240 = vmatpush1.msra.mxu0 %v1223
    %1241 = vmatprep.subr.mxu0 %v1226
    %1242 = vmatpush1.msra.mxu0 %v1225
    %1243 = vmatprep.subr.mxu0 %v1228
    %1244 = vmatpush1.msra.mxu0 %v1227
    %1245 = vmatprep.subr.mxu0 %v1230
    %1246 = vmatpush1.msra.mxu0 %v1229
    %1247 = vmatprep.subr.mxu0 %v1232
    %1248 = vmatpush1.msra.mxu0 %v1231
    %1249 = vmatprep.subr.mxu0 %v1234
    %1250 = vmatpush1.msra.mxu0 %v1233
    %1251 = vmatprep.subr.mxu0 %v1236
    %1252 = vmatpush1.msra.mxu0 %v1235
    %1253 = vmatprep.subr.mxu0 0.0
    %1254 = vmatpush1.msra.mxu0 0.0
    %1255 = vmatprep.subr.mxu0 0.0
    %1256 = vmatpush1.msra.mxu0 0.0
    %1257 = vmatprep.subr.mxu0 0.0
    %1258 = vmatpush1.msra.mxu0 0.0
    %1259 = vmatprep.subr.mxu0 0.0
    %1260 = vmatpush1.msra.mxu0 0.0
    %1261 = vmatprep.subr.mxu0 0.0
    %1262 = vmatpush1.msra.mxu0 0.0
    %1263 = vmatprep.subr.mxu0 0.0
    %1264 = vmatpush1.msra.mxu0 0.0
    %1265 = vmatprep.subr.mxu0 0.0
    %1266 = vmatpush1.msra.mxu0 0.0
    %1267 = vmatprep.subr.mxu0 0.0
    %1268 = vmatpush1.msra.mxu0 0.0
    %1269 = vmatprep.subr.mxu0 0.0
    %1270 = vmatpush1.msra.mxu0 0.0
    %1271 = vmatprep.subr.mxu0 0.0
    %1272 = vmatpush1.msra.mxu0 0.0
    %1273 = vmatprep.subr.mxu0 0.0
    %1274 = vmatpush1.msra.mxu0 0.0
    %1275 = vmatprep.subr.mxu0 0.0
    %1276 = vmatpush1.msra.mxu0 0.0
    %1277 = vmatprep.subr.mxu0 0.0
    %1278 = vmatpush1.msra.mxu0 0.0
    %1279 = vmatprep.subr.mxu0 0.0
    %1280 = vmatpush1.msra.mxu0 0.0
    %1281 = vmatprep.subr.mxu0 0.0
    %1282 = vmatpush1.msra.mxu0 0.0
    %1283 = vmatprep.subr.mxu0 0.0
    %1284 = vmatpush1.msra.mxu0 0.0
    %1285 = vmatprep.subr.mxu0 0.0
    %1286 = vmatpush1.msra.mxu0 0.0
    %1287 = vmatprep.subr.mxu0 0.0
    %1288 = vmatpush1.msra.mxu0 0.0
    %1289 = vmatprep.subr.mxu0 0.0
    %1290 = vmatpush1.msra.mxu0 0.0
    %1291 = vmatprep.subr.mxu0 0.0
    %1292 = vmatpush1.msra.mxu0 0.0
    %1293 = vmatprep.subr.mxu0 0.0
    %1294 = vmatpush1.msra.mxu0 0.0
    %1295 = vmatprep.subr.mxu0 0.0
    %1296 = vmatpush1.msra.mxu0 0.0
    %1297 = vmatprep.subr.mxu0 0.0
    %1298 = vmatpush1.msra.mxu0 0.0
    %1299 = vmatprep.subr.mxu0 0.0
    %1300 = vmatpush1.msra.mxu0 0.0
    %1301 = vmatprep.mubr.f32.mxu0 0.0
    %1302 = vmatmul.mubr.f32.gmra.mrb[0].mxu0 %v122
    %v1303 = vpop.f32.mrb[0].mxu0
    %v1304 = vadd.f32 %v73, %v1303
    %v1305 = vpop.f32.mrb[0].mxu0
    %v1306 = vadd.f32 %v73, %v1305
    %1307 = vmatprep.mubr.f32.mxu0 0.0
    %1308 = vmatmul.mubr.f32.gmra.mrb[0].mxu0 %v125
    %v1309 = vpop.f32.mrb[0].mxu0
    %v1310 = vadd.f32 %v78, %v1309
    %v1311 = vpop.f32.mrb[0].mxu0
    %v1312 = vadd.f32 %v78, %v1311
    %1313 = vmatprep.mubr.f32.mxu0 0.0
    %1314 = vmatmul.mubr.f32.gmra.mrb[0].mxu0 %v128
    %v1315 = vpop.f32.mrb[0].mxu0
    %v1316 = vadd.f32 %v83, %v1315
    %v1317 = vpop.f32.mrb[0].mxu0
    %v1318 = vadd.f32 %v83, %v1317
    %1319 = vmatprep.mubr.f32.mxu0 0.0
    %1320 = vmatmul.mubr.f32.gmra.mrb[0].mxu0 %v131
    %v1321 = vpop.f32.mrb[0].mxu0
    %v1322 = vadd.f32 %v88, %v1321
    %v1323 = vpop.f32.mrb[0].mxu0
    %v1324 = vadd.f32 %v88, %v1323
    %1325 = vmatprep.mubr.f32.mxu0 0.0
    %1326 = vmatmul.mubr.f32.gmra.mrb[0].mxu0 %v134
    %v1327 = vpop.f32.mrb[0].mxu0
    %v1328 = vadd.f32 %v93, %v1327
    %v1329 = vpop.f32.mrb[0].mxu0
    %v1330 = vadd.f32 %v93, %v1329
    %1331 = vmatprep.mubr.f32.mxu0 0.0
    %1332 = vmatmul.mubr.f32.gmra.mrb[0].mxu0 %v137
    %v1333 = vpop.f32.mrb[0].mxu0
    %v1334 = vadd.f32 %v98, %v1333
    %v1335 = vpop.f32.mrb[0].mxu0
    %v1336 = vadd.f32 %v98, %v1335
    %1337 = vmatprep.mubr.f32.mxu0 0.0
    %1338 = vmatmul.mubr.f32.gmra.mrb[0].mxu0 %v140
    %v1339 = vpop.f32.mrb[0].mxu0
    %v1340 = vadd.f32 %v103, %v1339
    %v1341 = vpop.f32.mrb[0].mxu0
    %v1342 = vadd.f32 %v103, %v1341
    %1343 = vmatprep.mubr.f32.mxu0 0.0
    %1344 = vmatmul.mubr.f32.gmra.mrb[0].mxu0 %v143
    %v1345 = vpop.f32.mrb[0].mxu0
    %v1346 = vadd.f32 %v108, %v1345
    %v1347 = vpop.f32.mrb[0].mxu0
    %v1348 = vadd.f32 %v108, %v1347
    %1349 = vmatprep.mubr.f32.mxu0 0.0
    %1350 = vmatmul.mubr.f32.gmra.mrb[0].mxu0 %v146
    %v1351 = vpop.f32.mrb[0].mxu0
    %v1352 = vadd.f32 %v113, %v1351
    %v1353 = vpop.f32.mrb[0].mxu0
    %v1354 = vadd.f32 %v113, %v1353
    %1355 = vmatprep.mubr.f32.mxu0 0.0
    %1356 = vmatmul.mubr.f32.gmra.mrb[0].mxu0 %v149
    %v1357 = vpop.f32.mrb[0].mxu0
    %v1358 = vadd.f32 %v118, %v1357
    %v1359 = vpop.f32.mrb[0].mxu0
    %v1360 = vadd.f32 %v118, %v1359
    %1361 = vdwg.mxu0
    %1362 = vxpose.xlu0.b32.start [1/16] %v1310, 128
    %1363 = vxpose.xlu0.b32.cont [2/16] 0.0, 128
    %1364 = vxpose.xlu0.b32.cont [3/16] 0.0, 128
    %1365 = vxpose.xlu0.b32.cont [4/16] 0.0, 128
    %1366 = vxpose.xlu0.b32.cont [5/16] 0.0, 128
    %1367 = vxpose.xlu0.b32.cont [6/16] 0.0, 128
    %1368 = vxpose.xlu0.b32.cont [7/16] 0.0, 128
    %1369 = vxpose.xlu0.b32.cont [8/16] 0.0, 128
    %1370 = vxpose.xlu0.b32.cont [9/16] 0.0, 128
    %1371 = vxpose.xlu0.b32.cont [10/16] 0.0, 128
    %1372 = vxpose.xlu0.b32.cont [11/16] 0.0, 128
    %1373 = vxpose.xlu0.b32.cont [12/16] 0.0, 128
    %1374 = vxpose.xlu0.b32.cont [13/16] 0.0, 128
    %1375 = vxpose.xlu0.b32.cont [14/16] 0.0, 128
    %1376 = vxpose.xlu0.b32.cont [15/16] 0.0, 128
    %1377 = vxpose.xlu0.b32.end [16/16] 0.0, 128
    %v1378 = vpop.trf.xlu0
    %v1379 = vpop.trf.xlu0
    %v1380 = vpop.trf.xlu0
    %v1381 = vpop.trf.xlu0
    %v1382 = vpop.trf.xlu0
    %v1383 = vpop.trf.xlu0
    %v1384 = vpop.trf.xlu0
    %v1385 = vpop.trf.xlu0
    %v1386 = vpop.trf.xlu0
    %v1387 = vpop.trf.xlu0
    %v1388 = vpop.trf.xlu0
    %v1389 = vpop.trf.xlu0
    %v1390 = vpop.trf.xlu0
    %v1391 = vpop.trf.xlu0
    %v1392 = vpop.trf.xlu0
    %v1393 = vpop.trf.xlu0
    %1394 = vxpose.xlu0.b32.start [1/16] %v1312, 128
    %1395 = vxpose.xlu0.b32.cont [2/16] 0.0, 128
    %1396 = vxpose.xlu0.b32.cont [3/16] 0.0, 128
    %1397 = vxpose.xlu0.b32.cont [4/16] 0.0, 128
    %1398 = vxpose.xlu0.b32.cont [5/16] 0.0, 128
    %1399 = vxpose.xlu0.b32.cont [6/16] 0.0, 128
    %1400 = vxpose.xlu0.b32.cont [7/16] 0.0, 128
    %1401 = vxpose.xlu0.b32.cont [8/16] 0.0, 128
    %1402 = vxpose.xlu0.b32.cont [9/16] 0.0, 128
    %1403 = vxpose.xlu0.b32.cont [10/16] 0.0, 128
    %1404 = vxpose.xlu0.b32.cont [11/16] 0.0, 128
    %1405 = vxpose.xlu0.b32.cont [12/16] 0.0, 128
    %1406 = vxpose.xlu0.b32.cont [13/16] 0.0, 128
    %1407 = vxpose.xlu0.b32.cont [14/16] 0.0, 128
    %1408 = vxpose.xlu0.b32.cont [15/16] 0.0, 128
    %1409 = vxpose.xlu0.b32.end [16/16] 0.0, 128
    %v1410 = vpop.trf.xlu0
    %v1411 = vpop.trf.xlu0
    %v1412 = vpop.trf.xlu0
    %v1413 = vpop.trf.xlu0
    %v1414 = vpop.trf.xlu0
    %v1415 = vpop.trf.xlu0
    %v1416 = vpop.trf.xlu0
    %v1417 = vpop.trf.xlu0
    %v1418 = vpop.trf.xlu0
    %v1419 = vpop.trf.xlu0
    %v1420 = vpop.trf.xlu0
    %v1421 = vpop.trf.xlu0
    %v1422 = vpop.trf.xlu0
    %v1423 = vpop.trf.xlu0
    %v1424 = vpop.trf.xlu0
    %v1425 = vpop.trf.xlu0
    %v1427 = vsel %vm340, %v1378, 0
    %v1430 = vsel %vm340, %v1379, 0
    %v1433 = vsel %vm340, %v1380, 0
    %v1436 = vsel %vm340, %v1381, 0
    %v1439 = vsel %vm340, %v1382, 0
    %v1442 = vsel %vm340, %v1383, 0
    %v1445 = vsel %vm340, %v1384, 0
    %v1448 = vsel %vm340, %v1385, 0
    %v1451 = vsel %vm340, %v1386, 0
    %v1454 = vsel %vm340, %v1387, 0
    %v1457 = vsel %vm340, %v1388, 0
    %v1460 = vsel %vm340, %v1389, 0
    %v1463 = vsel %vm340, %v1390, 0
    %v1466 = vsel %vm340, %v1391, 0
    %v1469 = vsel %vm340, %v1392, 0
    %v1472 = vsel %vm340, %v1393, 0
    %v1475 = vsel %vm340, %v1410, 0
    %v1478 = vsel %vm340, %v1411, 0
    %v1481 = vsel %vm340, %v1412, 0
    %v1484 = vsel %vm340, %v1413, 0
    %v1487 = vsel %vm340, %v1414, 0
    %v1490 = vsel %vm340, %v1415, 0
    %v1493 = vsel %vm340, %v1416, 0
    %v1496 = vsel %vm340, %v1417, 0
    %v1499 = vsel %vm340, %v1418, 0
    %v1502 = vsel %vm340, %v1419, 0
    %v1505 = vsel %vm340, %v1420, 0
    %v1508 = vsel %vm340, %v1421, 0
    %v1511 = vsel %vm340, %v1422, 0
    %v1514 = vsel %vm340, %v1423, 0
    %v1517 = vsel %vm340, %v1424, 0
    %v1520 = vsel %vm340, %v1425, 0
    %1522 = vmatprep.subr.mxu0 %v1306
    %1523 = vmatpush1.msra.mxu0 %v1304
    %1524 = vmatprep.subr.mxu0 0.0
    %1525 = vmatpush1.msra.mxu0 0.0
    %1526 = vmatprep.subr.mxu0 0.0
    %1527 = vmatpush1.msra.mxu0 0.0
    %1528 = vmatprep.subr.mxu0 0.0
    %1529 = vmatpush1.msra.mxu0 0.0
    %1530 = vmatprep.subr.mxu0 0.0
    %1531 = vmatpush1.msra.mxu0 0.0
    %1532 = vmatprep.subr.mxu0 0.0
    %1533 = vmatpush1.msra.mxu0 0.0
    %1534 = vmatprep.subr.mxu0 0.0
    %1535 = vmatpush1.msra.mxu0 0.0
    %1536 = vmatprep.subr.mxu0 0.0
    %1537 = vmatpush1.msra.mxu0 0.0
    %1538 = vmatprep.subr.mxu0 0.0
    %1539 = vmatpush1.msra.mxu0 0.0
    %1540 = vmatprep.subr.mxu0 0.0
    %1541 = vmatpush1.msra.mxu0 0.0
    %1542 = vmatprep.subr.mxu0 0.0
    %1543 = vmatpush1.msra.mxu0 0.0
    %1544 = vmatprep.subr.mxu0 0.0
    %1545 = vmatpush1.msra.mxu0 0.0
    %1546 = vmatprep.subr.mxu0 0.0
    %1547 = vmatpush1.msra.mxu0 0.0
    %1548 = vmatprep.subr.mxu0 0.0
    %1549 = vmatpush1.msra.mxu0 0.0
    %1550 = vmatprep.subr.mxu0 0.0
    %1551 = vmatpush1.msra.mxu0 0.0
    %1552 = vmatprep.subr.mxu0 0.0
    %1553 = vmatpush1.msra.mxu0 0.0
    %1554 = vmatprep.subr.mxu0 0.0
    %1555 = vmatpush1.msra.mxu0 0.0
    %1556 = vmatprep.subr.mxu0 0.0
    %1557 = vmatpush1.msra.mxu0 0.0
    %1558 = vmatprep.subr.mxu0 0.0
    %1559 = vmatpush1.msra.mxu0 0.0
    %1560 = vmatprep.subr.mxu0 0.0
    %1561 = vmatpush1.msra.mxu0 0.0
    %1562 = vmatprep.subr.mxu0 0.0
    %1563 = vmatpush1.msra.mxu0 0.0
    %1564 = vmatprep.subr.mxu0 0.0
    %1565 = vmatpush1.msra.mxu0 0.0
    %1566 = vmatprep.subr.mxu0 0.0
    %1567 = vmatpush1.msra.mxu0 0.0
    %1568 = vmatprep.subr.mxu0 0.0
    %1569 = vmatpush1.msra.mxu0 0.0
    %1570 = vmatprep.subr.mxu0 0.0
    %1571 = vmatpush1.msra.mxu0 0.0
    %1572 = vmatprep.subr.mxu0 0.0
    %1573 = vmatpush1.msra.mxu0 0.0
    %1574 = vmatprep.subr.mxu0 0.0
    %1575 = vmatpush1.msra.mxu0 0.0
    %1576 = vmatprep.subr.mxu0 0.0
    %1577 = vmatpush1.msra.mxu0 0.0
    %1578 = vmatprep.subr.mxu0 0.0
    %1579 = vmatpush1.msra.mxu0 0.0
    %1580 = vmatprep.subr.mxu0 0.0
    %1581 = vmatpush1.msra.mxu0 0.0
    %1582 = vmatprep.subr.mxu0 0.0
    %1583 = vmatpush1.msra.mxu0 0.0
    %1584 = vmatprep.subr.mxu0 0.0
    %1585 = vmatpush1.msra.mxu0 0.0
    %1586 = vmatprep.mubr.f32.mxu0 0.0
    %1587 = vmatmul.mubr.f32.gmra.mrb[0].mxu0 %v1427
    %v1588 = vpop.f32.mrb[0].mxu0
    %v1589 = vadd.f32 0.0, %v1588
    %v1590 = vpop.f32.mrb[0].mxu0
    %v1591 = vadd.f32 0.0, %v1590
    %1592 = vmatprep.mubr.f32.mxu0 0.0
    %1593 = vmatmul.mubr.f32.gmra.mrb[0].mxu0 %v1430
    %v1594 = vpop.f32.mrb[0].mxu0
    %v1595 = vadd.f32 0.0, %v1594
    %v1596 = vpop.f32.mrb[0].mxu0
    %v1597 = vadd.f32 0.0, %v1596
    %1598 = vmatprep.mubr.f32.mxu0 0.0
    %1599 = vmatmul.mubr.f32.gmra.mrb[0].mxu0 %v1433
    %v1600 = vpop.f32.mrb[0].mxu0
    %v1601 = vadd.f32 0.0, %v1600
    %v1602 = vpop.f32.mrb[0].mxu0
    %v1603 = vadd.f32 0.0, %v1602
    %1604 = vmatprep.mubr.f32.mxu0 0.0
    %1605 = vmatmul.mubr.f32.gmra.mrb[0].mxu0 %v1436
    %v1606 = vpop.f32.mrb[0].mxu0
    %v1607 = vadd.f32 0.0, %v1606
    %v1608 = vpop.f32.mrb[0].mxu0
    %v1609 = vadd.f32 0.0, %v1608
    %1610 = vmatprep.mubr.f32.mxu0 0.0
    %1611 = vmatmul.mubr.f32.gmra.mrb[0].mxu0 %v1439
    %v1612 = vpop.f32.mrb[0].mxu0
    %v1613 = vadd.f32 0.0, %v1612
    %v1614 = vpop.f32.mrb[0].mxu0
    %v1615 = vadd.f32 0.0, %v1614
    %1616 = vmatprep.mubr.f32.mxu0 0.0
    %1617 = vmatmul.mubr.f32.gmra.mrb[0].mxu0 %v1442
    %v1618 = vpop.f32.mrb[0].mxu0
    %v1619 = vadd.f32 0.0, %v1618
    %v1620 = vpop.f32.mrb[0].mxu0
    %v1621 = vadd.f32 0.0, %v1620
    %1622 = vmatprep.mubr.f32.mxu0 0.0
    %1623 = vmatmul.mubr.f32.gmra.mrb[0].mxu0 %v1445
    %v1624 = vpop.f32.mrb[0].mxu0
    %v1625 = vadd.f32 0.0, %v1624
    %v1626 = vpop.f32.mrb[0].mxu0
    %v1627 = vadd.f32 0.0, %v1626
    %1628 = vmatprep.mubr.f32.mxu0 0.0
    %1629 = vmatmul.mubr.f32.gmra.mrb[0].mxu0 %v1448
    %v1630 = vpop.f32.mrb[0].mxu0
    %v1631 = vadd.f32 0.0, %v1630
    %v1632 = vpop.f32.mrb[0].mxu0
    %v1633 = vadd.f32 0.0, %v1632
    %1634 = vmatprep.mubr.f32.mxu0 0.0
    %1635 = vmatmul.mubr.f32.gmra.mrb[0].mxu0 %v1451
    %v1636 = vpop.f32.mrb[0].mxu0
    %v1637 = vadd.f32 0.0, %v1636
    %v1638 = vpop.f32.mrb[0].mxu0
    %v1639 = vadd.f32 0.0, %v1638
    %1640 = vmatprep.mubr.f32.mxu0 0.0
    %1641 = vmatmul.mubr.f32.gmra.mrb[0].mxu0 %v1454
    %v1642 = vpop.f32.mrb[0].mxu0
    %v1643 = vadd.f32 0.0, %v1642
    %v1644 = vpop.f32.mrb[0].mxu0
    %v1645 = vadd.f32 0.0, %v1644
    %1646 = vmatprep.mubr.f32.mxu0 0.0
    %1647 = vmatmul.mubr.f32.gmra.mrb[0].mxu0 %v1457
    %v1648 = vpop.f32.mrb[0].mxu0
    %v1649 = vadd.f32 0.0, %v1648
    %v1650 = vpop.f32.mrb[0].mxu0
    %v1651 = vadd.f32 0.0, %v1650
    %1652 = vmatprep.mubr.f32.mxu0 0.0
    %1653 = vmatmul.mubr.f32.gmra.mrb[0].mxu0 %v1460
    %v1654 = vpop.f32.mrb[0].mxu0
    %v1655 = vadd.f32 0.0, %v1654
    %v1656 = vpop.f32.mrb[0].mxu0
    %v1657 = vadd.f32 0.0, %v1656
    %1658 = vmatprep.mubr.f32.mxu0 0.0
    %1659 = vmatmul.mubr.f32.gmra.mrb[0].mxu0 %v1463
    %v1660 = vpop.f32.mrb[0].mxu0
    %v1661 = vadd.f32 0.0, %v1660
    %v1662 = vpop.f32.mrb[0].mxu0
    %v1663 = vadd.f32 0.0, %v1662
    %1664 = vmatprep.mubr.f32.mxu0 0.0
    %1665 = vmatmul.mubr.f32.gmra.mrb[0].mxu0 %v1466
    %v1666 = vpop.f32.mrb[0].mxu0
    %v1667 = vadd.f32 0.0, %v1666
    %v1668 = vpop.f32.mrb[0].mxu0
    %v1669 = vadd.f32 0.0, %v1668
    %1670 = vmatprep.mubr.f32.mxu0 0.0
    %1671 = vmatmul.mubr.f32.gmra.mrb[0].mxu0 %v1469
    %v1672 = vpop.f32.mrb[0].mxu0
    %v1673 = vadd.f32 0.0, %v1672
    %v1674 = vpop.f32.mrb[0].mxu0
    %v1675 = vadd.f32 0.0, %v1674
    %1676 = vmatprep.mubr.f32.mxu0 0.0
    %1677 = vmatmul.mubr.f32.gmra.mrb[0].mxu0 %v1472
    %v1678 = vpop.f32.mrb[0].mxu0
    %v1679 = vadd.f32 0.0, %v1678
    %v1680 = vpop.f32.mrb[0].mxu0
    %v1681 = vadd.f32 0.0, %v1680
    %1682 = vmatprep.mubr.f32.mxu0 0.0
    %1683 = vmatmul.mubr.f32.gmra.mrb[0].mxu0 %v1475
    %v1684 = vpop.f32.mrb[0].mxu0
    %v1685 = vadd.f32 0.0, %v1684
    %v1686 = vpop.f32.mrb[0].mxu0
    %v1687 = vadd.f32 0.0, %v1686
    %1688 = vmatprep.mubr.f32.mxu0 0.0
    %1689 = vmatmul.mubr.f32.gmra.mrb[0].mxu0 %v1478
    %v1690 = vpop.f32.mrb[0].mxu0
    %v1691 = vadd.f32 0.0, %v1690
    %v1692 = vpop.f32.mrb[0].mxu0
    %v1693 = vadd.f32 0.0, %v1692
    %1694 = vmatprep.mubr.f32.mxu0 0.0
    %1695 = vmatmul.mubr.f32.gmra.mrb[0].mxu0 %v1481
    %v1696 = vpop.f32.mrb[0].mxu0
    %v1697 = vadd.f32 0.0, %v1696
    %v1698 = vpop.f32.mrb[0].mxu0
    %v1699 = vadd.f32 0.0, %v1698
    %1700 = vmatprep.mubr.f32.mxu0 0.0
    %1701 = vmatmul.mubr.f32.gmra.mrb[0].mxu0 %v1484
    %v1702 = vpop.f32.mrb[0].mxu0
    %v1703 = vadd.f32 0.0, %v1702
    %v1704 = vpop.f32.mrb[0].mxu0
    %v1705 = vadd.f32 0.0, %v1704
    %1706 = vmatprep.mubr.f32.mxu0 0.0
    %1707 = vmatmul.mubr.f32.gmra.mrb[0].mxu0 %v1487
    %v1708 = vpop.f32.mrb[0].mxu0
    %v1709 = vadd.f32 0.0, %v1708
    %v1710 = vpop.f32.mrb[0].mxu0
    %v1711 = vadd.f32 0.0, %v1710
    %1712 = vmatprep.mubr.f32.mxu0 0.0
    %1713 = vmatmul.mubr.f32.gmra.mrb[0].mxu0 %v1490
    %v1714 = vpop.f32.mrb[0].mxu0
    %v1715 = vadd.f32 0.0, %v1714
    %v1716 = vpop.f32.mrb[0].mxu0
    %v1717 = vadd.f32 0.0, %v1716
    %1718 = vmatprep.mubr.f32.mxu0 0.0
    %1719 = vmatmul.mubr.f32.gmra.mrb[0].mxu0 %v1493
    %v1720 = vpop.f32.mrb[0].mxu0
    %v1721 = vadd.f32 0.0, %v1720
    %v1722 = vpop.f32.mrb[0].mxu0
    %v1723 = vadd.f32 0.0, %v1722
    %1724 = vmatprep.mubr.f32.mxu0 0.0
    %1725 = vmatmul.mubr.f32.gmra.mrb[0].mxu0 %v1496
    %v1726 = vpop.f32.mrb[0].mxu0
    %v1727 = vadd.f32 0.0, %v1726
    %v1728 = vpop.f32.mrb[0].mxu0
    %v1729 = vadd.f32 0.0, %v1728
    %1730 = vmatprep.mubr.f32.mxu0 0.0
    %1731 = vmatmul.mubr.f32.gmra.mrb[0].mxu0 %v1499
    %v1732 = vpop.f32.mrb[0].mxu0
    %v1733 = vadd.f32 0.0, %v1732
    %v1734 = vpop.f32.mrb[0].mxu0
    %v1735 = vadd.f32 0.0, %v1734
    %1736 = vmatprep.mubr.f32.mxu0 0.0
    %1737 = vmatmul.mubr.f32.gmra.mrb[0].mxu0 %v1502
    %v1738 = vpop.f32.mrb[0].mxu0
    %v1739 = vadd.f32 0.0, %v1738
    %v1740 = vpop.f32.mrb[0].mxu0
    %v1741 = vadd.f32 0.0, %v1740
    %1742 = vmatprep.mubr.f32.mxu0 0.0
    %1743 = vmatmul.mubr.f32.gmra.mrb[0].mxu0 %v1505
    %v1744 = vpop.f32.mrb[0].mxu0
    %v1745 = vadd.f32 0.0, %v1744
    %v1746 = vpop.f32.mrb[0].mxu0
    %v1747 = vadd.f32 0.0, %v1746
    %1748 = vmatprep.mubr.f32.mxu0 0.0
    %1749 = vmatmul.mubr.f32.gmra.mrb[0].mxu0 %v1508
    %v1750 = vpop.f32.mrb[0].mxu0
    %v1751 = vadd.f32 0.0, %v1750
    %v1752 = vpop.f32.mrb[0].mxu0
    %v1753 = vadd.f32 0.0, %v1752
    %1754 = vmatprep.mubr.f32.mxu0 0.0
    %1755 = vmatmul.mubr.f32.gmra.mrb[0].mxu0 %v1511
    %v1756 = vpop.f32.mrb[0].mxu0
    %v1757 = vadd.f32 0.0, %v1756
    %v1758 = vpop.f32.mrb[0].mxu0
    %v1759 = vadd.f32 0.0, %v1758
    %1760 = vmatprep.mubr.f32.mxu0 0.0
    %1761 = vmatmul.mubr.f32.gmra.mrb[0].mxu0 %v1514
    %v1762 = vpop.f32.mrb[0].mxu0
    %v1763 = vadd.f32 0.0, %v1762
    %v1764 = vpop.f32.mrb[0].mxu0
    %v1765 = vadd.f32 0.0, %v1764
    %1766 = vmatprep.mubr.f32.mxu0 0.0
    %1767 = vmatmul.mubr.f32.gmra.mrb[0].mxu0 %v1517
    %v1768 = vpop.f32.mrb[0].mxu0
    %v1769 = vadd.f32 0.0, %v1768
    %v1770 = vpop.f32.mrb[0].mxu0
    %v1771 = vadd.f32 0.0, %v1770
    %1772 = vmatprep.mubr.f32.mxu0 0.0
    %1773 = vmatmul.mubr.f32.gmra.mrb[0].mxu0 %v1520
    %v1774 = vpop.f32.mrb[0].mxu0
    %v1775 = vadd.f32 0.0, %v1774
    %v1776 = vpop.f32.mrb[0].mxu0
    %v1777 = vadd.f32 0.0, %v1776
    %1778 = vdwg.mxu0
    %v1779 = vmax.f32 %v1589, %v1601
    %v1780 = vmax.f32 %v1595, %v1607
    %v1781 = vmax.f32 %v1779, %v1613
    %v1782 = vmax.f32 %v1780, %v1619
    %v1783 = vmax.f32 %v1781, %v1625
    %v1784 = vmax.f32 %v1782, %v1631
    %v1785 = vmax.f32 %v1783, %v1637
    %v1786 = vmax.f32 %v1784, %v1643
    %v1787 = vmax.f32 %v1785, %v1649
    %v1788 = vmax.f32 %v1786, %v1655
    %v1789 = vmax.f32 %v1787, %v1661
    %v1790 = vmax.f32 %v1788, %v1667
    %v1791 = vmax.f32 %v1789, %v1673
    %v1792 = vmax.f32 %v1790, %v1679
    %v1793 = vmax.f32 %v1791, %v1685
    %v1794 = vmax.f32 %v1792, %v1691
    %v1795 = vmax.f32 %v1793, %v1697
    %v1796 = vmax.f32 %v1794, %v1703
    %v1797 = vmax.f32 %v1795, %v1709
    %v1798 = vmax.f32 %v1796, %v1715
    %v1799 = vmax.f32 %v1797, %v1721
    %v1800 = vmax.f32 %v1798, %v1727
    %v1801 = vmax.f32 %v1799, %v1733
    %v1802 = vmax.f32 %v1800, %v1739
    %v1803 = vmax.f32 %v1801, %v1745
    %v1804 = vmax.f32 %v1802, %v1751
    %v1805 = vmax.f32 %v1803, %v1757
    %v1806 = vmax.f32 %v1804, %v1763
    %v1807 = vmax.f32 %v1805, %v1769
    %v1808 = vmax.f32 %v1806, %v1775
    %v1809 = vmax.f32 %v1807, %v1808
    %v1810 = vrot.slane %v1809, 4
    %v1811 = vmax.f32 %v1809, %v1810
    %v1812 = vrot.slane %v1811, 2
    %v1813 = vmax.f32 %v1811, %v1812
    %v1814 = vrot.slane %v1813, 1
    %v1815 = vmax.f32 %v1813, %v1814
    %v1816 = vmax.f32 %v1591, %v1603
    %v1817 = vmax.f32 %v1597, %v1609
    %v1818 = vmax.f32 %v1816, %v1615
    %v1819 = vmax.f32 %v1817, %v1621
    %v1820 = vmax.f32 %v1818, %v1627
    %v1821 = vmax.f32 %v1819, %v1633
    %v1822 = vmax.f32 %v1820, %v1639
    %v1823 = vmax.f32 %v1821, %v1645
    %v1824 = vmax.f32 %v1822, %v1651
    %v1825 = vmax.f32 %v1823, %v1657
    %v1826 = vmax.f32 %v1824, %v1663
    %v1827 = vmax.f32 %v1825, %v1669
    %v1828 = vmax.f32 %v1826, %v1675
    %v1829 = vmax.f32 %v1827, %v1681
    %v1830 = vmax.f32 %v1828, %v1687
    %v1831 = vmax.f32 %v1829, %v1693
    %v1832 = vmax.f32 %v1830, %v1699
    %v1833 = vmax.f32 %v1831, %v1705
    %v1834 = vmax.f32 %v1832, %v1711
    %v1835 = vmax.f32 %v1833, %v1717
    %v1836 = vmax.f32 %v1834, %v1723
    %v1837 = vmax.f32 %v1835, %v1729
    %v1838 = vmax.f32 %v1836, %v1735
    %v1839 = vmax.f32 %v1837, %v1741
    %v1840 = vmax.f32 %v1838, %v1747
    %v1841 = vmax.f32 %v1839, %v1753
    %v1842 = vmax.f32 %v1840, %v1759
    %v1843 = vmax.f32 %v1841, %v1765
    %v1844 = vmax.f32 %v1842, %v1771
    %v1845 = vmax.f32 %v1843, %v1777
    %v1846 = vmax.f32 %v1844, %v1845
    %v1847 = vrot.slane %v1846, 4
    %v1848 = vmax.f32 %v1846, %v1847
    %v1849 = vrot.slane %v1848, 2
    %v1850 = vmax.f32 %v1848, %v1849
    %v1851 = vrot.slane %v1850, 1
    %v1852 = vmax.f32 %v1850, %v1851
    %v1853 = vsub.f32 %v1589, %v1815
    %v1854 = vsub.f32 %v1591, %v1852
    %v1855 = vsub.f32 %v1595, %v1815
    %v1856 = vsub.f32 %v1597, %v1852
    %v1857 = vsub.f32 %v1601, %v1815
    %v1858 = vsub.f32 %v1603, %v1852
    %v1859 = vsub.f32 %v1607, %v1815
    %v1860 = vsub.f32 %v1609, %v1852
    %v1861 = vsub.f32 %v1613, %v1815
    %v1862 = vsub.f32 %v1615, %v1852
    %v1863 = vsub.f32 %v1619, %v1815
    %v1864 = vsub.f32 %v1621, %v1852
    %v1865 = vsub.f32 %v1625, %v1815
    %v1866 = vsub.f32 %v1627, %v1852
    %v1867 = vsub.f32 %v1631, %v1815
    %v1868 = vsub.f32 %v1633, %v1852
    %v1869 = vsub.f32 %v1637, %v1815
    %v1870 = vsub.f32 %v1639, %v1852
    %v1871 = vsub.f32 %v1643, %v1815
    %v1872 = vsub.f32 %v1645, %v1852
    %v1873 = vsub.f32 %v1649, %v1815
    %v1874 = vsub.f32 %v1651, %v1852
    %v1875 = vsub.f32 %v1655, %v1815
    %v1876 = vsub.f32 %v1657, %v1852
    %v1877 = vsub.f32 %v1661, %v1815
    %v1878 = vsub.f32 %v1663, %v1852
    %v1879 = vsub.f32 %v1667, %v1815
    %v1880 = vsub.f32 %v1669, %v1852
    %v1881 = vsub.f32 %v1673, %v1815
    %v1882 = vsub.f32 %v1675, %v1852
    %v1883 = vsub.f32 %v1679, %v1815
    %v1884 = vsub.f32 %v1681, %v1852
    %v1885 = vsub.f32 %v1685, %v1815
    %v1886 = vsub.f32 %v1687, %v1852
    %v1887 = vsub.f32 %v1691, %v1815
    %v1888 = vsub.f32 %v1693, %v1852
    %v1889 = vsub.f32 %v1697, %v1815
    %v1890 = vsub.f32 %v1699, %v1852
    %v1891 = vsub.f32 %v1703, %v1815
    %v1892 = vsub.f32 %v1705, %v1852
    %v1893 = vsub.f32 %v1709, %v1815
    %v1894 = vsub.f32 %v1711, %v1852
    %v1895 = vsub.f32 %v1715, %v1815
    %v1896 = vsub.f32 %v1717, %v1852
    %v1897 = vsub.f32 %v1721, %v1815
    %v1898 = vsub.f32 %v1723, %v1852
    %v1899 = vsub.f32 %v1727, %v1815
    %v1900 = vsub.f32 %v1729, %v1852
    %v1901 = vsub.f32 %v1733, %v1815
    %v1902 = vsub.f32 %v1735, %v1852
    %v1903 = vsub.f32 %v1739, %v1815
    %v1904 = vsub.f32 %v1741, %v1852
    %v1905 = vsub.f32 %v1745, %v1815
    %v1906 = vsub.f32 %v1747, %v1852
    %v1907 = vsub.f32 %v1751, %v1815
    %v1908 = vsub.f32 %v1753, %v1852
    %v1909 = vsub.f32 %v1757, %v1815
    %v1910 = vsub.f32 %v1759, %v1852
    %v1911 = vsub.f32 %v1763, %v1815
    %v1912 = vsub.f32 %v1765, %v1852
    %v1913 = vsub.f32 %v1769, %v1815
    %v1914 = vsub.f32 %v1771, %v1852
    %v1915 = vsub.f32 %v1775, %v1815
    %v1916 = vsub.f32 %v1777, %v1852
    %v1917 = vmul.f32 %v1853, 1.442695
    %v1918 = vpow.pop %v1917
    %v1919 = vmul.f32 %v1854, 1.442695
    %v1920 = vpow.pop %v1919
    %v1921 = vmul.f32 %v1855, 1.442695
    %v1922 = vpow.pop %v1921
    %v1923 = vmul.f32 %v1856, 1.442695
    %v1924 = vpow.pop %v1923
    %v1925 = vmul.f32 %v1857, 1.442695
    %v1926 = vpow.pop %v1925
    %v1927 = vmul.f32 %v1858, 1.442695
    %v1928 = vpow.pop %v1927
    %v1929 = vmul.f32 %v1859, 1.442695
    %v1930 = vpow.pop %v1929
    %v1931 = vmul.f32 %v1860, 1.442695
    %v1932 = vpow.pop %v1931
    %v1933 = vmul.f32 %v1861, 1.442695
    %v1934 = vpow.pop %v1933
    %v1935 = vmul.f32 %v1862, 1.442695
    %v1936 = vpow.pop %v1935
    %v1937 = vmul.f32 %v1863, 1.442695
    %v1938 = vpow.pop %v1937
    %v1939 = vmul.f32 %v1864, 1.442695
    %v1940 = vpow.pop %v1939
    %v1941 = vmul.f32 %v1865, 1.442695
    %v1942 = vpow.pop %v1941
    %v1943 = vmul.f32 %v1866, 1.442695
    %v1944 = vpow.pop %v1943
    %v1945 = vmul.f32 %v1867, 1.442695
    %v1946 = vpow.pop %v1945
    %v1947 = vmul.f32 %v1868, 1.442695
    %v1948 = vpow.pop %v1947
    %v1949 = vmul.f32 %v1869, 1.442695
    %v1950 = vpow.pop %v1949
    %v1951 = vmul.f32 %v1870, 1.442695
    %v1952 = vpow.pop %v1951
    %v1953 = vmul.f32 %v1871, 1.442695
    %v1954 = vpow.pop %v1953
    %v1955 = vmul.f32 %v1872, 1.442695
    %v1956 = vpow.pop %v1955
    %v1957 = vmul.f32 %v1873, 1.442695
    %v1958 = vpow.pop %v1957
    %v1959 = vmul.f32 %v1874, 1.442695
    %v1960 = vpow.pop %v1959
    %v1961 = vmul.f32 %v1875, 1.442695
    %v1962 = vpow.pop %v1961
    %v1963 = vmul.f32 %v1876, 1.442695
    %v1964 = vpow.pop %v1963
    %v1965 = vmul.f32 %v1877, 1.442695
    %v1966 = vpow.pop %v1965
    %v1967 = vmul.f32 %v1878, 1.442695
    %v1968 = vpow.pop %v1967
    %v1969 = vmul.f32 %v1879, 1.442695
    %v1970 = vpow.pop %v1969
    %v1971 = vmul.f32 %v1880, 1.442695
    %v1972 = vpow.pop %v1971
    %v1973 = vmul.f32 %v1881, 1.442695
    %v1974 = vpow.pop %v1973
    %v1975 = vmul.f32 %v1882, 1.442695
    %v1976 = vpow.pop %v1975
    %v1977 = vmul.f32 %v1883, 1.442695
    %v1978 = vpow.pop %v1977
    %v1979 = vmul.f32 %v1884, 1.442695
    %v1980 = vpow.pop %v1979
    %v1981 = vmul.f32 %v1885, 1.442695
    %v1982 = vpow.pop %v1981
    %v1983 = vmul.f32 %v1886, 1.442695
    %v1984 = vpow.pop %v1983
    %v1985 = vmul.f32 %v1887, 1.442695
    %v1986 = vpow.pop %v1985
    %v1987 = vmul.f32 %v1888, 1.442695
    %v1988 = vpow.pop %v1987
    %v1989 = vmul.f32 %v1889, 1.442695
    %v1990 = vpow.pop %v1989
    %v1991 = vmul.f32 %v1890, 1.442695
    %v1992 = vpow.pop %v1991
    %v1993 = vmul.f32 %v1891, 1.442695
    %v1994 = vpow.pop %v1993
    %v1995 = vmul.f32 %v1892, 1.442695
    %v1996 = vpow.pop %v1995
    %v1997 = vmul.f32 %v1893, 1.442695
    %v1998 = vpow.pop %v1997
    %v1999 = vmul.f32 %v1894, 1.442695
    %v2000 = vpow.pop %v1999
    %v2001 = vmul.f32 %v1895, 1.442695
    %v2002 = vpow.pop %v2001
    %v2003 = vmul.f32 %v1896, 1.442695
    %v2004 = vpow.pop %v2003
    %v2005 = vmul.f32 %v1897, 1.442695
    %v2006 = vpow.pop %v2005
    %v2007 = vmul.f32 %v1898, 1.442695
    %v2008 = vpow.pop %v2007
    %v2009 = vmul.f32 %v1899, 1.442695
    %v2010 = vpow.pop %v2009
    %v2011 = vmul.f32 %v1900, 1.442695
    %v2012 = vpow.pop %v2011
    %v2013 = vmul.f32 %v1901, 1.442695
    %v2014 = vpow.pop %v2013
    %v2015 = vmul.f32 %v1902, 1.442695
    %v2016 = vpow.pop %v2015
    %v2017 = vmul.f32 %v1903, 1.442695
    %v2018 = vpow.pop %v2017
    %v2019 = vmul.f32 %v1904, 1.442695
    %v2020 = vpow.pop %v2019
    %v2021 = vmul.f32 %v1905, 1.442695
    %v2022 = vpow.pop %v2021
    %v2023 = vmul.f32 %v1906, 1.442695
    %v2024 = vpow.pop %v2023
    %v2025 = vmul.f32 %v1907, 1.442695
    %v2026 = vpow.pop %v2025
    %v2027 = vmul.f32 %v1908, 1.442695
    %v2028 = vpow.pop %v2027
    %v2029 = vmul.f32 %v1909, 1.442695
    %v2030 = vpow.pop %v2029
    %v2031 = vmul.f32 %v1910, 1.442695
    %v2032 = vpow.pop %v2031
    %v2033 = vmul.f32 %v1911, 1.442695
    %v2034 = vpow.pop %v2033
    %v2035 = vmul.f32 %v1912, 1.442695
    %v2036 = vpow.pop %v2035
    %v2037 = vmul.f32 %v1913, 1.442695
    %v2038 = vpow.pop %v2037
    %v2039 = vmul.f32 %v1914, 1.442695
    %v2040 = vpow.pop %v2039
    %v2041 = vmul.f32 %v1915, 1.442695
    %v2042 = vpow.pop %v2041
    %v2043 = vmul.f32 %v1916, 1.442695
    %v2044 = vpow.pop %v2043
    %v2045 = vadd.f32 %v1918, %v1922
    %v2046 = vadd.f32 %v2045, %v1926
    %v2047 = vadd.f32 %v2046, %v1930
    %v2048 = vadd.f32 %v2047, %v1934
    %v2049 = vadd.f32 %v2048, %v1938
    %v2050 = vadd.f32 %v2049, %v1942
    %v2051 = vadd.f32 %v2050, %v1946
    %v2052 = vadd.f32 %v2051, %v1950
    %v2053 = vadd.f32 %v2052, %v1954
    %v2054 = vadd.f32 %v2053, %v1958
    %v2055 = vadd.f32 %v2054, %v1962
    %v2056 = vadd.f32 %v2055, %v1966
    %v2057 = vadd.f32 %v2056, %v1970
    %v2058 = vadd.f32 %v2057, %v1974
    %v2059 = vadd.f32 %v2058, %v1978
    %v2060 = vadd.f32 %v2059, %v1982
    %v2061 = vadd.f32 %v2060, %v1986
    %v2062 = vadd.f32 %v2061, %v1990
    %v2063 = vadd.f32 %v2062, %v1994
    %v2064 = vadd.f32 %v2063, %v1998
    %v2065 = vadd.f32 %v2064, %v2002
    %v2066 = vadd.f32 %v2065, %v2006
    %v2067 = vadd.f32 %v2066, %v2010
    %v2068 = vadd.f32 %v2067, %v2014
    %v2069 = vadd.f32 %v2068, %v2018
    %v2070 = vadd.f32 %v2069, %v2022
    %v2071 = vadd.f32 %v2070, %v2026
    %v2072 = vadd.f32 %v2071, %v2030
    %v2073 = vadd.f32 %v2072, %v2034
    %v2074 = vadd.f32 %v2073, %v2038
    %v2075 = vadd.f32 %v2074, %v2042
    %v2076 = vrot.slane %v2075, 4
    %v2077 = vadd.f32 %v2075, %v2076
    %v2078 = vrot.slane %v2077, 2
    %v2079 = vadd.f32 %v2077, %v2078
    %v2080 = vrot.slane %v2079, 1
    %v2081 = vadd.f32 %v2079, %v2080
    %v2082 = vadd.f32 %v1920, %v1924
    %v2083 = vadd.f32 %v2082, %v1928
    %v2084 = vadd.f32 %v2083, %v1932
    %v2085 = vadd.f32 %v2084, %v1936
    %v2086 = vadd.f32 %v2085, %v1940
    %v2087 = vadd.f32 %v2086, %v1944
    %v2088 = vadd.f32 %v2087, %v1948
    %v2089 = vadd.f32 %v2088, %v1952
    %v2090 = vadd.f32 %v2089, %v1956
    %v2091 = vadd.f32 %v2090, %v1960
    %v2092 = vadd.f32 %v2091, %v1964
    %v2093 = vadd.f32 %v2092, %v1968
    %v2094 = vadd.f32 %v2093, %v1972
    %v2095 = vadd.f32 %v2094, %v1976
    %v2096 = vadd.f32 %v2095, %v1980
    %v2097 = vadd.f32 %v2096, %v1984
    %v2098 = vadd.f32 %v2097, %v1988
    %v2099 = vadd.f32 %v2098, %v1992
    %v2100 = vadd.f32 %v2099, %v1996
    %v2101 = vadd.f32 %v2100, %v2000
    %v2102 = vadd.f32 %v2101, %v2004
    %v2103 = vadd.f32 %v2102, %v2008
    %v2104 = vadd.f32 %v2103, %v2012
    %v2105 = vadd.f32 %v2104, %v2016
    %v2106 = vadd.f32 %v2105, %v2020
    %v2107 = vadd.f32 %v2106, %v2024
    %v2108 = vadd.f32 %v2107, %v2028
    %v2109 = vadd.f32 %v2108, %v2032
    %v2110 = vadd.f32 %v2109, %v2036
    %v2111 = vadd.f32 %v2110, %v2040
    %v2112 = vadd.f32 %v2111, %v2044
    %v2113 = vrot.slane %v2112, 4
    %v2114 = vadd.f32 %v2112, %v2113
    %v2115 = vrot.slane %v2114, 2
    %v2116 = vadd.f32 %v2114, %v2115
    %v2117 = vrot.slane %v2116, 1
    %v2118 = vadd.f32 %v2116, %v2117
    %v2119 = vrcp.pop %v2081
    %v2120 = vrcp.pop %v2118
    %v2121 = vmul.f32 %v2081, %v2119
    %v2122 = vmul.f32 %v2118, %v2120
    %v2123 = vsub.f32 2.0, %v2121
    %v2124 = vsub.f32 2.0, %v2122
    %v2125 = vmul.f32 %v2119, %v2123
    %v2126 = vmul.f32 %v2120, %v2124
    %2127 = vmatprep.subr.mxu0 %v1920
    %2128 = vmatpush1.msra.mxu0 %v1918
    %2129 = vmatprep.subr.mxu0 %v1924
    %2130 = vmatpush1.msra.mxu0 %v1922
    %2131 = vmatprep.subr.mxu0 %v1928
    %2132 = vmatpush1.msra.mxu0 %v1926
    %2133 = vmatprep.subr.mxu0 %v1932
    %2134 = vmatpush1.msra.mxu0 %v1930
    %2135 = vmatprep.subr.mxu0 %v1936
    %2136 = vmatpush1.msra.mxu0 %v1934
    %2137 = vmatprep.subr.mxu0 %v1940
    %2138 = vmatpush1.msra.mxu0 %v1938
    %2139 = vmatprep.subr.mxu0 %v1944
    %2140 = vmatpush1.msra.mxu0 %v1942
    %2141 = vmatprep.subr.mxu0 %v1948
    %2142 = vmatpush1.msra.mxu0 %v1946
    %2143 = vmatprep.subr.mxu0 %v1952
    %2144 = vmatpush1.msra.mxu0 %v1950
    %2145 = vmatprep.subr.mxu0 %v1956
    %2146 = vmatpush1.msra.mxu0 %v1954
    %2147 = vmatprep.subr.mxu0 %v1960
    %2148 = vmatpush1.msra.mxu0 %v1958
    %2149 = vmatprep.subr.mxu0 %v1964
    %2150 = vmatpush1.msra.mxu0 %v1962
    %2151 = vmatprep.subr.mxu0 %v1968
    %2152 = vmatpush1.msra.mxu0 %v1966
    %2153 = vmatprep.subr.mxu0 %v1972
    %2154 = vmatpush1.msra.mxu0 %v1970
    %2155 = vmatprep.subr.mxu0 %v1976
    %2156 = vmatpush1.msra.mxu0 %v1974
    %2157 = vmatprep.subr.mxu0 %v1980
    %2158 = vmatpush1.msra.mxu0 %v1978
    %2159 = vmatprep.subr.mxu0 %v1984
    %2160 = vmatpush1.msra.mxu0 %v1982
    %2161 = vmatprep.subr.mxu0 %v1988
    %2162 = vmatpush1.msra.mxu0 %v1986
    %2163 = vmatprep.subr.mxu0 %v1992
    %2164 = vmatpush1.msra.mxu0 %v1990
    %2165 = vmatprep.subr.mxu0 %v1996
    %2166 = vmatpush1.msra.mxu0 %v1994
    %2167 = vmatprep.subr.mxu0 %v2000
    %2168 = vmatpush1.msra.mxu0 %v1998
    %2169 = vmatprep.subr.mxu0 %v2004
    %2170 = vmatpush1.msra.mxu0 %v2002
    %2171 = vmatprep.subr.mxu0 %v2008
    %2172 = vmatpush1.msra.mxu0 %v2006
    %2173 = vmatprep.subr.mxu0 %v2012
    %2174 = vmatpush1.msra.mxu0 %v2010
    %2175 = vmatprep.subr.mxu0 %v2016
    %2176 = vmatpush1.msra.mxu0 %v2014
    %2177 = vmatprep.subr.mxu0 %v2020
    %2178 = vmatpush1.msra.mxu0 %v2018
    %2179 = vmatprep.subr.mxu0 %v2024
    %2180 = vmatpush1.msra.mxu0 %v2022
    %2181 = vmatprep.subr.mxu0 %v2028
    %2182 = vmatpush1.msra.mxu0 %v2026
    %2183 = vmatprep.subr.mxu0 %v2032
    %2184 = vmatpush1.msra.mxu0 %v2030
    %2185 = vmatprep.subr.mxu0 %v2036
    %2186 = vmatpush1.msra.mxu0 %v2034
    %2187 = vmatprep.subr.mxu0 %v2040
    %2188 = vmatpush1.msra.mxu0 %v2038
    %2189 = vmatprep.subr.mxu0 %v2044
    %2190 = vmatpush1.msra.mxu0 %v2042
    %2191 = vmatprep.mubr.f32.mxu0 %v1318
    %2192 = vmatmul.mubr.f32.gmra.mrb[0].mxu0 %v1316
    %v2193 = vpop.f32.mrb[0].mxu0
    %v2194 = vadd.f32 0.0, %v2193
    %v2195 = vpop.f32.mrb[0].mxu0
    %v2196 = vadd.f32 0.0, %v2195
    %2197 = vmatprep.mubr.f32.mxu0 %v1324
    %2198 = vmatmul.mubr.f32.gmra.mrb[0].mxu0 %v1322
    %v2199 = vpop.f32.mrb[0].mxu0
    %v2200 = vadd.f32 0.0, %v2199
    %v2201 = vpop.f32.mrb[0].mxu0
    %v2202 = vadd.f32 0.0, %v2201
    %2203 = vmatprep.mubr.f32.mxu0 %v1330
    %2204 = vmatmul.mubr.f32.gmra.mrb[0].mxu0 %v1328
    %v2205 = vpop.f32.mrb[0].mxu0
    %v2206 = vadd.f32 0.0, %v2205
    %v2207 = vpop.f32.mrb[0].mxu0
    %v2208 = vadd.f32 0.0, %v2207
    %2209 = vmatprep.mubr.f32.mxu0 %v1336
    %2210 = vmatmul.mubr.f32.gmra.mrb[0].mxu0 %v1334
    %v2211 = vpop.f32.mrb[0].mxu0
    %v2212 = vadd.f32 0.0, %v2211
    %v2213 = vpop.f32.mrb[0].mxu0
    %v2214 = vadd.f32 0.0, %v2213
    %2215 = vmatprep.mubr.f32.mxu0 %v1342
    %2216 = vmatmul.mubr.f32.gmra.mrb[0].mxu0 %v1340
    %v2217 = vpop.f32.mrb[0].mxu0
    %v2218 = vadd.f32 0.0, %v2217
    %v2219 = vpop.f32.mrb[0].mxu0
    %v2220 = vadd.f32 0.0, %v2219
    %2221 = vmatprep.mubr.f32.mxu0 %v1348
    %2222 = vmatmul.mubr.f32.gmra.mrb[0].mxu0 %v1346
    %v2223 = vpop.f32.mrb[0].mxu0
    %v2224 = vadd.f32 0.0, %v2223
    %v2225 = vpop.f32.mrb[0].mxu0
    %v2226 = vadd.f32 0.0, %v2225
    %2227 = vmatprep.mubr.f32.mxu0 %v1354
    %2228 = vmatmul.mubr.f32.gmra.mrb[0].mxu0 %v1352
    %v2229 = vpop.f32.mrb[0].mxu0
    %v2230 = vadd.f32 0.0, %v2229
    %v2231 = vpop.f32.mrb[0].mxu0
    %v2232 = vadd.f32 0.0, %v2231
    %2233 = vmatprep.mubr.f32.mxu0 %v1360
    %2234 = vmatmul.mubr.f32.gmra.mrb[0].mxu0 %v1358
    %v2235 = vpop.f32.mrb[0].mxu0
    %v2236 = vadd.f32 0.0, %v2235
    %v2237 = vpop.f32.mrb[0].mxu0
    %v2238 = vadd.f32 0.0, %v2237
    %2239 = vdwg.mxu0
    %v2240 = vmul.f32 %v1155, %v1221
    %v2241 = vmul.f32 %v1155, %v1222
    %v2242 = vmul.f32 %v1155, %v1223
    %v2243 = vmul.f32 %v1155, %v1224
    %v2244 = vmul.f32 %v1155, %v1225
    %v2245 = vmul.f32 %v1155, %v1226
    %v2246 = vmul.f32 %v1155, %v1227
    %v2247 = vmul.f32 %v1155, %v1228
    %v2248 = vmul.f32 %v1155, %v1229
    %v2249 = vmul.f32 %v1155, %v1230
    %v2250 = vmul.f32 %v1155, %v1231
    %v2251 = vmul.f32 %v1155, %v1232
    %v2252 = vmul.f32 %v1155, %v1233
    %v2253 = vmul.f32 %v1155, %v1234
    %v2254 = vmul.f32 %v1155, %v1235
    %v2255 = vmul.f32 %v1155, %v1236
    %v2256 = vmul.f32 %v2194, %v2125
    %v2257 = vmul.f32 %v2196, %v2126
    %v2258 = vmul.f32 %v2200, %v2125
    %v2259 = vmul.f32 %v2202, %v2126
    %v2260 = vmul.f32 %v2206, %v2125
    %v2261 = vmul.f32 %v2208, %v2126
    %v2262 = vmul.f32 %v2212, %v2125
    %v2263 = vmul.f32 %v2214, %v2126
    %v2264 = vmul.f32 %v2218, %v2125
    %v2265 = vmul.f32 %v2220, %v2126
    %v2266 = vmul.f32 %v2224, %v2125
    %v2267 = vmul.f32 %v2226, %v2126
    %v2268 = vmul.f32 %v2230, %v2125
    %v2269 = vmul.f32 %v2232, %v2126
    %v2270 = vmul.f32 %v2236, %v2125
    %v2271 = vmul.f32 %v2238, %v2126
    %v2272 = vadd.f32 %v2240, %v2256
    %v2273 = vadd.f32 %v2241, %v2257
    %v2274 = vadd.f32 %v2242, %v2258
    %v2275 = vadd.f32 %v2243, %v2259
    %v2276 = vadd.f32 %v2244, %v2260
    %v2277 = vadd.f32 %v2245, %v2261
    %v2278 = vadd.f32 %v2246, %v2262
    %v2279 = vadd.f32 %v2247, %v2263
    %v2280 = vadd.f32 %v2248, %v2264
    %v2281 = vadd.f32 %v2249, %v2265
    %v2282 = vadd.f32 %v2250, %v2266
    %v2283 = vadd.f32 %v2251, %v2267
    %v2284 = vadd.f32 %v2252, %v2268
    %v2285 = vadd.f32 %v2253, %v2269
    %v2286 = vadd.f32 %v2254, %v2270
    %v2287 = vadd.f32 %v2255, %v2271
    %s2288 = scalar_lea.vmem [#allocation6], 128
    %2289 = vst [vmem:[%s2288] sm:$0xff] %v2272
    %2290 = vst [vmem:[%s2288 + $0x8] sm:$0xff] %v2273
    %2291 = vst [vmem:[%s2288 + $0x10] sm:$0xff] %v2274
    %2292 = vst [vmem:[%s2288 + $0x18] sm:$0xff] %v2275
    %2293 = vst [vmem:[%s2288 + $0x20] sm:$0xff] %v2276
    %2294 = vst [vmem:[%s2288 + $0x28] sm:$0xff] %v2277
    %2295 = vst [vmem:[%s2288 + $0x30] sm:$0xff] %v2278
    %2296 = vst [vmem:[%s2288 + $0x38] sm:$0xff] %v2279
    %2297 = vst [vmem:[%s2288 + $0x40] sm:$0xff] %v2280
    %2298 = vst [vmem:[%s2288 + $0x48] sm:$0xff] %v2281
    %2299 = vst [vmem:[%s2288 + $0x50] sm:$0xff] %v2282
    %2300 = vst [vmem:[%s2288 + $0x58] sm:$0xff] %v2283
    %2301 = vst [vmem:[%s2288 + $0x60] sm:$0xff] %v2284
    %2302 = vst [vmem:[%s2288 + $0x68] sm:$0xff] %v2285
    %2303 = vst [vmem:[%s2288 + $0x70] sm:$0xff] %v2286
    %2304 = vst [vmem:[%s2288 + $0x78] sm:$0xff] %v2287
    // Predicated region
    $region22: #{tpu_custom_call.1} parent=1 // pred_check
      _
    $region23: #{tpu_custom_call.1} parent=1 // pred_check_branch
      %2306 = sbr.rel (0) target = $region25
    $region24: #{tpu_custom_call.1} parent=1 // pred_region
      %s2308 = ssub.s32 4096, 4096
      %2309 = vsyncadd [#allocation5], %s2308
      %s2310 = sshll.u32 [#allocation6], 4
      %s2311 = int_to_ptr.vmem [resolvable:$true] %s2310
      %2316 = dma.vmem_to_hbm [thread:$0]  %s2311, 4096, %s4, [#allocation5], 256, 256, 16
    $region25: #{tpu_custom_call.1} parent=1 // pred_fallthru
      _
    // Predicated region
    $region26: #{tpu_custom_call.1} parent=1 // pred_check
      _
    $region27: #{tpu_custom_call.1} parent=1 // pred_check_branch
      %2318 = sbr.rel (0) target = $region29
    $region28: #{tpu_custom_call.1} parent=1 // pred_region
      %2319 = dma.done [#allocation5], 4096
    $region29: #{tpu_custom_call.1} parent=1 // pred_fallthru
      _
    %2320 = vsyncpa [#allocation4], 1
    %2321 = vsyncpa [#allocation5], 1

</llo_original>
